<compile_context>
chip_gen: v7x
topology: tpu7x:2x2x1
jax: 0.10.0
libtpu: 0.0.40
codegen_flags: <defaults>
</compile_context>

<pallas_src>
import functools

import jax
import jax.numpy as jnp
import numpy as np
from jax import lax
from jax.experimental import pallas as pl
from jax.experimental.pallas import tpu as pltpu


def _round_up(x, m):
    return ((x + m - 1) // m) * m


def _sigmoid_f32(x):
    # sigmoid(x) = 0.5 * tanh(0.5*x) + 0.5 : single EUP push + VPU mul/add.
    return 0.5 * jnp.tanh(0.5 * x) + 0.5


def lstm_kernel(gx_ref, wh_ref, h0_ref, c0_ref, out_ref, cN_ref,
                h_sc, c_sc, *, seq_len, chunked, unroll):
    """One grid step processes t_blk timesteps for one batch block.

    gx_ref : (t_blk, b_blk, 4*Hp)  precomputed x@Wx^T + b, lane-aligned chunks
    wh_ref : (Hp, 4*Hp)            Wh^T, whole array resident in VMEM
    out_ref: (t_blk, b_blk, Hp)    hidden states for this time block
    cN_ref : (b_blk, Hp)           final cell state (written on last block)
    h_sc/c_sc: (b_blk, Hp) f32     carries, persist across time blocks
    seq_len: true T if the time axis was padded, else None (no masking)
    """
    tb = pl.program_id(1)                     # time-block index (sequential)
    t_blk = gx_ref.shape[0]
    Hp = h_sc.shape[-1]
    w_dtype = wh_ref.dtype

    @pl.when(tb == 0)
    def _():
        h_sc[...] = h0_ref[...].astype(jnp.float32)
        c_sc[...] = c0_ref[...].astype(jnp.float32)

    def step(t, carry):
        h_prev, c_prev = carry                 # f32, live in registers
        h_b = h_prev.astype(w_dtype)           # bf16 (or f32) MXU operand
        gx_t = gx_ref[t].astype(jnp.float32)   # (b_blk, 4*Hp)

        if chunked:
            # Large Hp: per-gate dots + immediate activation to avoid
            # materializing a (b_blk, 4*Hp) f32 slab (register spills).
            def gate(k):
                return gx_t[:, k * Hp:(k + 1) * Hp] + jnp.dot(
                    h_b, wh_ref[:, k * Hp:(k + 1) * Hp],
                    preferred_element_type=jnp.float32)
            i_g = _sigmoid_f32(gate(0))
            f_g = _sigmoid_f32(gate(1))
            o_g = _sigmoid_f32(gate(2))
            n_g = jnp.tanh(gate(3))
        else:
            gates = gx_t + jnp.dot(h_b, wh_ref[...],
                                   preferred_element_type=jnp.float32)
            # Module's chunk order: i, f, o, n; Hp is a multiple of 128 so the
            # three sigmoids run as one contiguous lane-aligned slab.
            sig = _sigmoid_f32(gates[:, 0:3 * Hp])
            i_g = sig[:, 0 * Hp:1 * Hp]
            f_g = sig[:, 1 * Hp:2 * Hp]
            o_g = sig[:, 2 * Hp:3 * Hp]
            n_g = jnp.tanh(gates[:, 3 * Hp:4 * Hp])

        c_new = f_g * c_prev + i_g * n_g
        h_new = o_g * jnp.tanh(c_new)

        if seq_len is not None:
            # Tail guard: padded timesteps must not touch the carries
            # (zero gx rows would give f = sigmoid(0) = 0.5 and decay c).
            valid = (tb * t_blk + t) < seq_len
            c_new = jnp.where(valid, c_new, c_prev)
            h_new = jnp.where(valid, h_new, h_prev)

        out_ref[t] = h_new.astype(out_ref.dtype)   # lane-dense store
        return (h_new, c_new)

    # Carries stay in registers across the unrolled block; scratch is touched
    # once at block entry (read) and once at block exit (write).
    h_fin, c_fin = lax.fori_loop(0, t_blk, step, (h_sc[...], c_sc[...]),
                                 unroll=unroll)
    h_sc[...] = h_fin
    c_sc[...] = c_fin

    @pl.when(tb == pl.num_programs(1) - 1)
    def _():
        cN_ref[...] = c_fin.astype(cN_ref.dtype)


def lstm_forward(x, h0, c0, W_x, W_h, b_x, b_h, *,
                 t_blk_max=32, mxu_dtype=jnp.bfloat16, gx_dtype=jnp.float32):
    """x: (T, B, I); h0, c0: (B, H). Returns (outputs (T,B,H), (hN, cN)).

    mxu_dtype: dtype of the recurrent-matmul operands (Wh^T and h_prev).
               bf16 (default) is MXU-native on all generations; pass
               jnp.float32 for an exact match with an f32 reference.
    gx_dtype : storage dtype of the precomputed input gates (f32 default;
               bf16 halves the dominant HBM/DMA stream at some accuracy cost).
    """
    T, B, I = x.shape
    H = h0.shape[-1]
    dtype = x.dtype
    f32 = jnp.float32

    Hp = _round_up(H, 128)          # lane-aligned gate chunks / dense stores
    Bp0 = _round_up(B, 8)           # f32 sublane grain

    # Optional batch-parallel grid axis (lets v7x's 2nd TensorCore run an
    # independent sub-batch recurrence; near-neutral on 1-TC chips).
    if Bp0 >= 16:
        b_blk = _round_up(pl.cdiv(Bp0, 2), 8)
        n_bb = 2
    else:
        b_blk = Bp0
        n_bb = 1
    Bp = n_bb * b_blk

    w_dtype = f32 if mxu_dtype is None else mxu_dtype
    gx_bytes = jnp.dtype(gx_dtype).itemsize
    out_bytes = jnp.dtype(dtype).itemsize
    w_bytes = jnp.dtype(w_dtype).itemsize

    # ---- Per-generation VMEM budget; solve for the time block. ----
    try:
        vmem_cap = int(pltpu.get_tpu_info().vmem_capacity_bytes)
    except Exception:
        vmem_cap = 64 * 1024 * 1024                 # conservative (v7x)
    budget = vmem_cap - 8 * 1024 * 1024             # headroom for internals

    fixed = (Hp * 4 * Hp * w_bytes                  # Wh^T, single-buffered
             + 4 * b_blk * Hp * 4                   # h0, c0 (double-buffered)
             + 2 * b_blk * Hp * out_bytes           # cN (double-buffered)
             + 2 * b_blk * Hp * 4)                  # h/c carry scratch
    per_t = 2 * b_blk * 4 * Hp * gx_bytes + 2 * b_blk * Hp * out_bytes
    t_blk_fit = max(1, (budget - fixed) // per_t) if budget > fixed else 1
    t_blk = int(max(1, min(t_blk_max, T, t_blk_fit)))

    # Pad T up to a multiple of t_blk (tail masked in-kernel) — no t_blk=1
    # fallback for prime/odd T.
    n_tb = pl.cdiv(T, t_blk)
    Tp = n_tb * t_blk
    seq_len = T if Tp != T else None

    chunked = Hp >= 1024
    unroll = t_blk if Hp <= 512 else max(1, min(8, t_blk))

    # ---- Pre-pack W_x / bias into lane-aligned gate slots [i | f | o | n]. --
    wx4 = W_x.astype(f32).reshape(4, H, I)
    wx4 = jnp.pad(wx4, ((0, 0), (0, Hp - H), (0, 0)))
    wx_packed = wx4.reshape(4 * Hp, I)                               # (4Hp, I)
    b4 = (b_x + b_h).astype(f32).reshape(4, H)
    b_packed = jnp.pad(b4, ((0, 0), (0, Hp - H))).reshape(4 * Hp)    # (4Hp,)

    # ---- Hoisted input projection: one big matmul, already gate-aligned. ----
    gx = x.reshape(T * B, I).astype(f32) @ wx_packed.T + b_packed    # (T*B,4Hp)
    gx = gx.reshape(T, B, 4 * Hp).astype(gx_dtype)
    gx = jnp.pad(gx, ((0, Tp - T), (0, Bp - B), (0, 0)))             # (Tp,Bp,4Hp)

    # ---- Recurrent weight: padded, transposed, gate-chunk aligned. ----
    w4 = W_h.astype(f32).reshape(4, H, H)                            # [g,out,in]
    w4 = jnp.pad(w4, ((0, 0), (0, Hp - H), (0, Hp - H)))
    wh_t = w4.transpose(2, 0, 1).reshape(Hp, 4 * Hp).astype(w_dtype)  # (Hp,4Hp)

    h0p = jnp.pad(h0.astype(f32), ((0, Bp - B), (0, Hp - H)))
    c0p = jnp.pad(c0.astype(f32), ((0, Bp - B), (0, Hp - H)))

    out_shapes = (
        jax.ShapeDtypeStruct((Tp, Bp, Hp), dtype),   # stacked hidden states
        jax.ShapeDtypeStruct((Bp, Hp), dtype),       # final c
    )

    grid_spec = pltpu.PrefetchScalarGridSpec(
        num_scalar_prefetch=0,
        grid=(n_bb, n_tb),                           # (batch blocks, time blocks)
        in_specs=[
            pl.BlockSpec((t_blk, b_blk, 4 * Hp), lambda bb, tb: (tb, bb, 0)),
            # Loop-invariant weight: whole array, single copy resident in VMEM.
            pl.BlockSpec(memory_space=pltpu.MemorySpace.VMEM),        # Wh^T
            pl.BlockSpec((b_blk, Hp), lambda bb, tb: (bb, 0)),        # h0
            pl.BlockSpec((b_blk, Hp), lambda bb, tb: (bb, 0)),        # c0
        ],
        out_specs=[
            pl.BlockSpec((t_blk, b_blk, Hp), lambda bb, tb: (tb, bb, 0)),
            pl.BlockSpec((b_blk, Hp), lambda bb, tb: (bb, 0)),        # cN
        ],
        scratch_shapes=[
            pltpu.VMEM((b_blk, Hp), jnp.float32),    # h carry
            pltpu.VMEM((b_blk, Hp), jnp.float32),    # c carry
        ],
    )

    est = fixed + per_t * t_blk
    vmem_limit = int(min(vmem_cap, max(int(est * 1.25), 32 * 1024 * 1024)))

    kernel = functools.partial(lstm_kernel, seq_len=seq_len,
                               chunked=chunked, unroll=unroll)

    outputs, cN = pl.pallas_call(
        kernel,
        out_shape=out_shapes,
        grid_spec=grid_spec,
        compiler_params=pltpu.CompilerParams(
            dimension_semantics=("parallel", "arbitrary"),   # time sequential
            vmem_limit_bytes=vmem_limit),
    )(gx, wh_t, h0p, c0p)

    # Un-pad; hN is just the last valid output row (no separate kernel output).
    outputs = outputs[:T, :B, :H]
    hN = outputs[T - 1]
    cN = cN[:B, :H]
    return outputs, (hN, cN)


def lstm_reference(x, h0, c0, W_x, W_h, b_x, b_h):
    """Pure-JAX reference mirroring the PyTorch module."""
    H = h0.shape[-1]

    def step(carry, x_t):
        h, c = carry
        gx = x_t @ W_x.T + b_x
        gh = h @ W_h.T + b_h
        g = gx + gh
        i = jax.nn.sigmoid(g[:, 0 * H:1 * H])
        f = jax.nn.sigmoid(g[:, 1 * H:2 * H])
        o = jax.nn.sigmoid(g[:, 2 * H:3 * H])
        n = jnp.tanh(g[:, 3 * H:4 * H])
        c = f * c + i * n
        h = o * jnp.tanh(c)
        return (h, c), h

    (hN, cN), outs = jax.lax.scan(step, (h0, c0), x)
    return outs, (hN, cN)


if __name__ == "__main__":
    # Small shapes consistent with the module's forward pass.
    T, B, I, H = 8, 2, 16, 32
    winit = 0.1

    key = jax.random.PRNGKey(0)
    kx, kh0, kc0, kwx, kwh, kbx, kbh = jax.random.split(key, 7)

    x = jax.random.normal(kx, (T, B, I), dtype=jnp.float32)
    h0 = jax.random.normal(kh0, (B, H), dtype=jnp.float32)
    c0 = jax.random.normal(kc0, (B, H), dtype=jnp.float32)

    W_x = jax.random.uniform(kwx, (4 * H, I), jnp.float32, -winit, winit)
    W_h = jax.random.uniform(kwh, (4 * H, H), jnp.float32, -winit, winit)
    b_x = jax.random.uniform(kbx, (4 * H,), jnp.float32, -winit, winit)
    b_h = jax.random.uniform(kbh, (4 * H,), jnp.float32, -winit, winit)

    outs_ref, (hN_ref, cN_ref) = lstm_reference(x, h0, c0, W_x, W_h, b_x, b_h)

    # 1) Exact path: f32 MXU operands, tight tolerance.
    fwd_f32 = jax.jit(functools.partial(lstm_forward, mxu_dtype=jnp.float32))
    outs, (hN, cN) = fwd_f32(x, h0, c0, W_x, W_h, b_x, b_h)
    jax.block_until_ready((outs, hN, cN))
    np.testing.assert_allclose(np.asarray(outs), np.asarray(outs_ref),
                               rtol=1e-5, atol=1e-5)
    np.testing.assert_allclose(np.asarray(hN), np.asarray(hN_ref),
                               rtol=1e-5, atol=1e-5)
    np.testing.assert_allclose(np.asarray(cN), np.asarray(cN_ref),
                               rtol=1e-5, atol=1e-5)

    # 2) Default bf16-MXU path, loose tolerance.
    fwd_bf16 = jax.jit(lstm_forward)
    outs_b, (hN_b, cN_b) = fwd_bf16(x, h0, c0, W_x, W_h, b_x, b_h)
    jax.block_until_ready((outs_b, hN_b, cN_b))
    np.testing.assert_allclose(np.asarray(outs_b), np.asarray(outs_ref),
                               rtol=2e-2, atol=2e-2)
    np.testing.assert_allclose(np.asarray(cN_b), np.asarray(cN_ref),
                               rtol=2e-2, atol=2e-2)

    # 3) Tail-masking path: time axis padded (t_blk=3 -> Tp=9 for T=8).
    fwd_tail = jax.jit(functools.partial(lstm_forward, mxu_dtype=jnp.float32,
                                         t_blk_max=3))
    outs_t, (hN_t, cN_t) = fwd_tail(x, h0, c0, W_x, W_h, b_x, b_h)
    jax.block_until_ready((outs_t, hN_t, cN_t))
    np.testing.assert_allclose(np.asarray(outs_t), np.asarray(outs_ref),
                               rtol=1e-5, atol=1e-5)
    np.testing.assert_allclose(np.asarray(cN_t), np.asarray(cN_ref),
                               rtol=1e-5, atol=1e-5)

    print("KERNEL_OK")
</pallas_src>

<mosaic_0001>
module attributes {stable_mosaic.version = 11 : i64} {
  func.func @lstm_kernel(%arg0: i32, %arg1: i32, %arg2: memref<8x8x512xf32, #tpu.memory_space<vmem>>, %arg3: memref<128x512xf32, #tpu.memory_space<vmem>>, %arg4: memref<8x128xf32, #tpu.memory_space<vmem>>, %arg5: memref<8x128xf32, #tpu.memory_space<vmem>>, %arg6: memref<8x8x128xf32, #tpu.memory_space<vmem>>, %arg7: memref<8x128xf32, #tpu.memory_space<vmem>>, %arg8: memref<8x128xf32, #tpu.memory_space<vmem>>, %arg9: memref<8x128xf32, #tpu.memory_space<vmem>>) attributes {dimension_semantics = [#tpu.dimension_semantics<parallel>, #tpu.dimension_semantics<arbitrary>], iteration_bounds = array<i64: 1, 1>, scalar_prefetch = 0 : i64, scratch_operands = 2 : i64, tpu.core_type = #tpu.core_type<tc>, window_params = [{transform_indices = @transform_0, window_bounds = array<i64: 8, 8, 512>}, {pipeline_mode = #tpu.pipeline_mode<synchronous>, transform_indices = @transform_1, window_bounds = array<i64: 128, 512>}, {transform_indices = @transform_2, window_bounds = array<i64: 8, 128>}, {transform_indices = @transform_3, window_bounds = array<i64: 8, 128>}, {transform_indices = @transform_4, window_bounds = array<i64: 8, 8, 128>}, {transform_indices = @transform_5, window_bounds = array<i64: 8, 128>}]} {
    %c0_i32 = arith.constant 0 : i32
    %0 = arith.cmpi eq, %arg1, %c0_i32 : i32
    %1 = arith.extui %0 : i1 to i32
    %c0_i32_0 = arith.constant 0 : i32
    %2 = arith.cmpi ne, %1, %c0_i32_0 : i32
    scf.if %2 {
      %c0_90 = arith.constant 0 : index
      %c0_91 = arith.constant 0 : index
      %234 = vector.load %arg4[%c0_90, %c0_91] : memref<8x128xf32, #tpu.memory_space<vmem>>, vector<8x128xf32>
      %c0_92 = arith.constant 0 : index
      %c0_93 = arith.constant 0 : index
      %235 = vector.load %arg8[%c0_92, %c0_93] : memref<8x128xf32, #tpu.memory_space<vmem>>, vector<8x128xf32>
      tpu.vector_store %arg8[%c0_92, %c0_93], %234 {strides = array<i32>} : memref<8x128xf32, #tpu.memory_space<vmem>>, vector<8x128xf32>,
      %c0_94 = arith.constant 0 : index
      %c0_95 = arith.constant 0 : index
      %236 = vector.load %arg5[%c0_94, %c0_95] : memref<8x128xf32, #tpu.memory_space<vmem>>, vector<8x128xf32>
      %c0_96 = arith.constant 0 : index
      %c0_97 = arith.constant 0 : index
      %237 = vector.load %arg9[%c0_96, %c0_97] : memref<8x128xf32, #tpu.memory_space<vmem>>, vector<8x128xf32>
      tpu.vector_store %arg9[%c0_96, %c0_97], %236 {strides = array<i32>} : memref<8x128xf32, #tpu.memory_space<vmem>>, vector<8x128xf32>,
    } else {
    }
    %c0 = arith.constant 0 : index
    %c0_1 = arith.constant 0 : index
    %3 = vector.load %arg8[%c0, %c0_1] : memref<8x128xf32, #tpu.memory_space<vmem>>, vector<8x128xf32>
    %c0_2 = arith.constant 0 : index
    %c0_3 = arith.constant 0 : index
    %4 = vector.load %arg9[%c0_2, %c0_3] : memref<8x128xf32, #tpu.memory_space<vmem>>, vector<8x128xf32>
    %c0_i32_4 = arith.constant 0 : i32
    %5 = arith.index_cast %c0_i32_4 : i32 to index
    %c0_5 = arith.constant 0 : index
    %c0_6 = arith.constant 0 : index
    %6 = vector.load %arg2[%5, %c0_5, %c0_6] : memref<8x8x512xf32, #tpu.memory_space<vmem>>, vector<1x8x512xf32>
    %7 = vector.shape_cast %6 : vector<1x8x512xf32> to vector<8x512xf32>
    %c0_7 = arith.constant 0 : index
    %c0_8 = arith.constant 0 : index
    %8 = vector.load %arg3[%c0_7, %c0_8] : memref<128x512xf32, #tpu.memory_space<vmem>>, vector<128x512xf32>
    %cst = arith.constant dense<0.000000e+00> : vector<8x512xf32>
    %9 = tpu.matmul %3, %8, %cst {dimension_numbers = #tpu.dot_dimension_numbers<[1], [0], [0], [1], [0, 0, 1, 1], [], []>} : vector<8x128xf32>, vector<128x512xf32>, vector<8x512xf32> -> vector<8x512xf32>
    %10 = arith.addf %7, %9 : vector<8x512xf32>
    %11 = vector.extract_strided_slice %10 {offsets = [0, 0], sizes = [8, 384], strides = [1, 1]} : vector<8x512xf32> to vector<8x384xf32>
    %cst_9 = arith.constant 5.000000e-01 : f32
    %12 = vector.broadcast %cst_9 : f32 to vector<8x384xf32>
    %13 = arith.mulf %12, %11 : vector<8x384xf32>
    %14 = math.tanh %13 : vector<8x384xf32>
    %cst_10 = arith.constant 5.000000e-01 : f32
    %15 = vector.broadcast %cst_10 : f32 to vector<8x384xf32>
    %16 = arith.mulf %15, %14 : vector<8x384xf32>
    %cst_11 = arith.constant 5.000000e-01 : f32
    %17 = vector.broadcast %cst_11 : f32 to vector<8x384xf32>
    %18 = arith.addf %16, %17 : vector<8x384xf32>
    %19 = vector.extract_strided_slice %18 {offsets = [0, 0], sizes = [8, 128], strides = [1, 1]} : vector<8x384xf32> to vector<8x128xf32>
    %20 = vector.extract_strided_slice %18 {offsets = [0, 128], sizes = [8, 128], strides = [1, 1]} : vector<8x384xf32> to vector<8x128xf32>
    %21 = vector.extract_strided_slice %18 {offsets = [0, 256], sizes = [8, 128], strides = [1, 1]} : vector<8x384xf32> to vector<8x128xf32>
    %22 = vector.extract_strided_slice %10 {offsets = [0, 384], sizes = [8, 128], strides = [1, 1]} : vector<8x512xf32> to vector<8x128xf32>
    %23 = math.tanh %22 : vector<8x128xf32>
    %24 = arith.mulf %20, %4 : vector<8x128xf32>
    %25 = arith.mulf %19, %23 : vector<8x128xf32>
    %26 = arith.addf %24, %25 : vector<8x128xf32>
    %27 = math.tanh %26 : vector<8x128xf32>
    %28 = arith.mulf %21, %27 : vector<8x128xf32>
    %29 = arith.index_cast %c0_i32_4 : i32 to index
    %c0_12 = arith.constant 0 : index
    %c0_13 = arith.constant 0 : index
    %30 = vector.load %arg6[%29, %c0_12, %c0_13] : memref<8x8x128xf32, #tpu.memory_space<vmem>>, vector<1x8x128xf32>
    %31 = vector.shape_cast %30 : vector<1x8x128xf32> to vector<8x128xf32>
    %32 = vector.shape_cast %28 : vector<8x128xf32> to vector<1x8x128xf32>
    tpu.vector_store %arg6[%29, %c0_12, %c0_13], %32 {strides = array<i32>} : memref<8x8x128xf32, #tpu.memory_space<vmem>>, vector<1x8x128xf32>,
    %c1_i32 = arith.constant 1 : i32
    %33 = arith.index_cast %c1_i32 : i32 to index
    %c0_14 = arith.constant 0 : index
    %c0_15 = arith.constant 0 : index
    %34 = vector.load %arg2[%33, %c0_14, %c0_15] : memref<8x8x512xf32, #tpu.memory_space<vmem>>, vector<1x8x512xf32>
    %35 = vector.shape_cast %34 : vector<1x8x512xf32> to vector<8x512xf32>
    %c0_16 = arith.constant 0 : index
    %c0_17 = arith.constant 0 : index
    %36 = vector.load %arg3[%c0_16, %c0_17] : memref<128x512xf32, #tpu.memory_space<vmem>>, vector<128x512xf32>
    %cst_18 = arith.constant dense<0.000000e+00> : vector<8x512xf32>
    %37 = tpu.matmul %28, %36, %cst_18 {dimension_numbers = #tpu.dot_dimension_numbers<[1], [0], [0], [1], [0, 0, 1, 1], [], []>} : vector<8x128xf32>, vector<128x512xf32>, vector<8x512xf32> -> vector<8x512xf32>
    %38 = arith.addf %35, %37 : vector<8x512xf32>
    %39 = vector.extract_strided_slice %38 {offsets = [0, 0], sizes = [8, 384], strides = [1, 1]} : vector<8x512xf32> to vector<8x384xf32>
    %cst_19 = arith.constant 5.000000e-01 : f32
    %40 = vector.broadcast %cst_19 : f32 to vector<8x384xf32>
    %41 = arith.mulf %40, %39 : vector<8x384xf32>
    %42 = math.tanh %41 : vector<8x384xf32>
    %cst_20 = arith.constant 5.000000e-01 : f32
    %43 = vector.broadcast %cst_20 : f32 to vector<8x384xf32>
    %44 = arith.mulf %43, %42 : vector<8x384xf32>
    %cst_21 = arith.constant 5.000000e-01 : f32
    %45 = vector.broadcast %cst_21 : f32 to vector<8x384xf32>
    %46 = arith.addf %44, %45 : vector<8x384xf32>
    %47 = vector.extract_strided_slice %46 {offsets = [0, 0], sizes = [8, 128], strides = [1, 1]} : vector<8x384xf32> to vector<8x128xf32>
    %48 = vector.extract_strided_slice %46 {offsets = [0, 128], sizes = [8, 128], strides = [1, 1]} : vector<8x384xf32> to vector<8x128xf32>
    %49 = vector.extract_strided_slice %46 {offsets = [0, 256], sizes = [8, 128], strides = [1, 1]} : vector<8x384xf32> to vector<8x128xf32>
    %50 = vector.extract_strided_slice %38 {offsets = [0, 384], sizes = [8, 128], strides = [1, 1]} : vector<8x512xf32> to vector<8x128xf32>
    %51 = math.tanh %50 : vector<8x128xf32>
    %52 = arith.mulf %48, %26 : vector<8x128xf32>
    %53 = arith.mulf %47, %51 : vector<8x128xf32>
    %54 = arith.addf %52, %53 : vector<8x128xf32>
    %55 = math.tanh %54 : vector<8x128xf32>
    %56 = arith.mulf %49, %55 : vector<8x128xf32>
    %57 = arith.index_cast %c1_i32 : i32 to index
    %c0_22 = arith.constant 0 : index
    %c0_23 = arith.constant 0 : index
    %58 = vector.load %arg6[%57, %c0_22, %c0_23] : memref<8x8x128xf32, #tpu.memory_space<vmem>>, vector<1x8x128xf32>
    %59 = vector.shape_cast %58 : vector<1x8x128xf32> to vector<8x128xf32>
    %60 = vector.shape_cast %56 : vector<8x128xf32> to vector<1x8x128xf32>
    tpu.vector_store %arg6[%57, %c0_22, %c0_23], %60 {strides = array<i32>} : memref<8x8x128xf32, #tpu.memory_space<vmem>>, vector<1x8x128xf32>,
    %c2_i32 = arith.constant 2 : i32
    %61 = arith.index_cast %c2_i32 : i32 to index
    %c0_24 = arith.constant 0 : index
    %c0_25 = arith.constant 0 : index
    %62 = vector.load %arg2[%61, %c0_24, %c0_25] : memref<8x8x512xf32, #tpu.memory_space<vmem>>, vector<1x8x512xf32>
    %63 = vector.shape_cast %62 : vector<1x8x512xf32> to vector<8x512xf32>
    %c0_26 = arith.constant 0 : index
    %c0_27 = arith.constant 0 : index
    %64 = vector.load %arg3[%c0_26, %c0_27] : memref<128x512xf32, #tpu.memory_space<vmem>>, vector<128x512xf32>
    %cst_28 = arith.constant dense<0.000000e+00> : vector<8x512xf32>
    %65 = tpu.matmul %56, %64, %cst_28 {dimension_numbers = #tpu.dot_dimension_numbers<[1], [0], [0], [1], [0, 0, 1, 1], [], []>} : vector<8x128xf32>, vector<128x512xf32>, vector<8x512xf32> -> vector<8x512xf32>
    %66 = arith.addf %63, %65 : vector<8x512xf32>
    %67 = vector.extract_strided_slice %66 {offsets = [0, 0], sizes = [8, 384], strides = [1, 1]} : vector<8x512xf32> to vector<8x384xf32>
    %cst_29 = arith.constant 5.000000e-01 : f32
    %68 = vector.broadcast %cst_29 : f32 to vector<8x384xf32>
    %69 = arith.mulf %68, %67 : vector<8x384xf32>
    %70 = math.tanh %69 : vector<8x384xf32>
    %cst_30 = arith.constant 5.000000e-01 : f32
    %71 = vector.broadcast %cst_30 : f32 to vector<8x384xf32>
    %72 = arith.mulf %71, %70 : vector<8x384xf32>
    %cst_31 = arith.constant 5.000000e-01 : f32
    %73 = vector.broadcast %cst_31 : f32 to vector<8x384xf32>
    %74 = arith.addf %72, %73 : vector<8x384xf32>
    %75 = vector.extract_strided_slice %74 {offsets = [0, 0], sizes = [8, 128], strides = [1, 1]} : vector<8x384xf32> to vector<8x128xf32>
    %76 = vector.extract_strided_slice %74 {offsets = [0, 128], sizes = [8, 128], strides = [1, 1]} : vector<8x384xf32> to vector<8x128xf32>
    %77 = vector.extract_strided_slice %74 {offsets = [0, 256], sizes = [8, 128], strides = [1, 1]} : vector<8x384xf32> to vector<8x128xf32>
    %78 = vector.extract_strided_slice %66 {offsets = [0, 384], sizes = [8, 128], strides = [1, 1]} : vector<8x512xf32> to vector<8x128xf32>
    %79 = math.tanh %78 : vector<8x128xf32>
    %80 = arith.mulf %76, %54 : vector<8x128xf32>
    %81 = arith.mulf %75, %79 : vector<8x128xf32>
    %82 = arith.addf %80, %81 : vector<8x128xf32>
    %83 = math.tanh %82 : vector<8x128xf32>
    %84 = arith.mulf %77, %83 : vector<8x128xf32>
    %85 = arith.index_cast %c2_i32 : i32 to index
    %c0_32 = arith.constant 0 : index
    %c0_33 = arith.constant 0 : index
    %86 = vector.load %arg6[%85, %c0_32, %c0_33] : memref<8x8x128xf32, #tpu.memory_space<vmem>>, vector<1x8x128xf32>
    %87 = vector.shape_cast %86 : vector<1x8x128xf32> to vector<8x128xf32>
    %88 = vector.shape_cast %84 : vector<8x128xf32> to vector<1x8x128xf32>
    tpu.vector_store %arg6[%85, %c0_32, %c0_33], %88 {strides = array<i32>} : memref<8x8x128xf32, #tpu.memory_space<vmem>>, vector<1x8x128xf32>,
    %c3_i32 = arith.constant 3 : i32
    %89 = arith.index_cast %c3_i32 : i32 to index
    %c0_34 = arith.constant 0 : index
    %c0_35 = arith.constant 0 : index
    %90 = vector.load %arg2[%89, %c0_34, %c0_35] : memref<8x8x512xf32, #tpu.memory_space<vmem>>, vector<1x8x512xf32>
    %91 = vector.shape_cast %90 : vector<1x8x512xf32> to vector<8x512xf32>
    %c0_36 = arith.constant 0 : index
    %c0_37 = arith.constant 0 : index
    %92 = vector.load %arg3[%c0_36, %c0_37] : memref<128x512xf32, #tpu.memory_space<vmem>>, vector<128x512xf32>
    %cst_38 = arith.constant dense<0.000000e+00> : vector<8x512xf32>
    %93 = tpu.matmul %84, %92, %cst_38 {dimension_numbers = #tpu.dot_dimension_numbers<[1], [0], [0], [1], [0, 0, 1, 1], [], []>} : vector<8x128xf32>, vector<128x512xf32>, vector<8x512xf32> -> vector<8x512xf32>
    %94 = arith.addf %91, %93 : vector<8x512xf32>
    %95 = vector.extract_strided_slice %94 {offsets = [0, 0], sizes = [8, 384], strides = [1, 1]} : vector<8x512xf32> to vector<8x384xf32>
    %cst_39 = arith.constant 5.000000e-01 : f32
    %96 = vector.broadcast %cst_39 : f32 to vector<8x384xf32>
    %97 = arith.mulf %96, %95 : vector<8x384xf32>
    %98 = math.tanh %97 : vector<8x384xf32>
    %cst_40 = arith.constant 5.000000e-01 : f32
    %99 = vector.broadcast %cst_40 : f32 to vector<8x384xf32>
    %100 = arith.mulf %99, %98 : vector<8x384xf32>
    %cst_41 = arith.constant 5.000000e-01 : f32
    %101 = vector.broadcast %cst_41 : f32 to vector<8x384xf32>
    %102 = arith.addf %100, %101 : vector<8x384xf32>
    %103 = vector.extract_strided_slice %102 {offsets = [0, 0], sizes = [8, 128], strides = [1, 1]} : vector<8x384xf32> to vector<8x128xf32>
    %104 = vector.extract_strided_slice %102 {offsets = [0, 128], sizes = [8, 128], strides = [1, 1]} : vector<8x384xf32> to vector<8x128xf32>
    %105 = vector.extract_strided_slice %102 {offsets = [0, 256], sizes = [8, 128], strides = [1, 1]} : vector<8x384xf32> to vector<8x128xf32>
    %106 = vector.extract_strided_slice %94 {offsets = [0, 384], sizes = [8, 128], strides = [1, 1]} : vector<8x512xf32> to vector<8x128xf32>
    %107 = math.tanh %106 : vector<8x128xf32>
    %108 = arith.mulf %104, %82 : vector<8x128xf32>
    %109 = arith.mulf %103, %107 : vector<8x128xf32>
    %110 = arith.addf %108, %109 : vector<8x128xf32>
    %111 = math.tanh %110 : vector<8x128xf32>
    %112 = arith.mulf %105, %111 : vector<8x128xf32>
    %113 = arith.index_cast %c3_i32 : i32 to index
    %c0_42 = arith.constant 0 : index
    %c0_43 = arith.constant 0 : index
    %114 = vector.load %arg6[%113, %c0_42, %c0_43] : memref<8x8x128xf32, #tpu.memory_space<vmem>>, vector<1x8x128xf32>
    %115 = vector.shape_cast %114 : vector<1x8x128xf32> to vector<8x128xf32>
    %116 = vector.shape_cast %112 : vector<8x128xf32> to vector<1x8x128xf32>
    tpu.vector_store %arg6[%113, %c0_42, %c0_43], %116 {strides = array<i32>} : memref<8x8x128xf32, #tpu.memory_space<vmem>>, vector<1x8x128xf32>,
    %c4_i32 = arith.constant 4 : i32
    %117 = arith.index_cast %c4_i32 : i32 to index
    %c0_44 = arith.constant 0 : index
    %c0_45 = arith.constant 0 : index
    %118 = vector.load %arg2[%117, %c0_44, %c0_45] : memref<8x8x512xf32, #tpu.memory_space<vmem>>, vector<1x8x512xf32>
    %119 = vector.shape_cast %118 : vector<1x8x512xf32> to vector<8x512xf32>
    %c0_46 = arith.constant 0 : index
    %c0_47 = arith.constant 0 : index
    %120 = vector.load %arg3[%c0_46, %c0_47] : memref<128x512xf32, #tpu.memory_space<vmem>>, vector<128x512xf32>
    %cst_48 = arith.constant dense<0.000000e+00> : vector<8x512xf32>
    %121 = tpu.matmul %112, %120, %cst_48 {dimension_numbers = #tpu.dot_dimension_numbers<[1], [0], [0], [1], [0, 0, 1, 1], [], []>} : vector<8x128xf32>, vector<128x512xf32>, vector<8x512xf32> -> vector<8x512xf32>
    %122 = arith.addf %119, %121 : vector<8x512xf32>
    %123 = vector.extract_strided_slice %122 {offsets = [0, 0], sizes = [8, 384], strides = [1, 1]} : vector<8x512xf32> to vector<8x384xf32>
    %cst_49 = arith.constant 5.000000e-01 : f32
    %124 = vector.broadcast %cst_49 : f32 to vector<8x384xf32>
    %125 = arith.mulf %124, %123 : vector<8x384xf32>
    %126 = math.tanh %125 : vector<8x384xf32>
    %cst_50 = arith.constant 5.000000e-01 : f32
    %127 = vector.broadcast %cst_50 : f32 to vector<8x384xf32>
    %128 = arith.mulf %127, %126 : vector<8x384xf32>
    %cst_51 = arith.constant 5.000000e-01 : f32
    %129 = vector.broadcast %cst_51 : f32 to vector<8x384xf32>
    %130 = arith.addf %128, %129 : vector<8x384xf32>
    %131 = vector.extract_strided_slice %130 {offsets = [0, 0], sizes = [8, 128], strides = [1, 1]} : vector<8x384xf32> to vector<8x128xf32>
    %132 = vector.extract_strided_slice %130 {offsets = [0, 128], sizes = [8, 128], strides = [1, 1]} : vector<8x384xf32> to vector<8x128xf32>
    %133 = vector.extract_strided_slice %130 {offsets = [0, 256], sizes = [8, 128], strides = [1, 1]} : vector<8x384xf32> to vector<8x128xf32>
    %134 = vector.extract_strided_slice %122 {offsets = [0, 384], sizes = [8, 128], strides = [1, 1]} : vector<8x512xf32> to vector<8x128xf32>
    %135 = math.tanh %134 : vector<8x128xf32>
    %136 = arith.mulf %132, %110 : vector<8x128xf32>
    %137 = arith.mulf %131, %135 : vector<8x128xf32>
    %138 = arith.addf %136, %137 : vector<8x128xf32>
    %139 = math.tanh %138 : vector<8x128xf32>
    %140 = arith.mulf %133, %139 : vector<8x128xf32>
    %141 = arith.index_cast %c4_i32 : i32 to index
    %c0_52 = arith.constant 0 : index
    %c0_53 = arith.constant 0 : index
    %142 = vector.load %arg6[%141, %c0_52, %c0_53] : memref<8x8x128xf32, #tpu.memory_space<vmem>>, vector<1x8x128xf32>
    %143 = vector.shape_cast %142 : vector<1x8x128xf32> to vector<8x128xf32>
    %144 = vector.shape_cast %140 : vector<8x128xf32> to vector<1x8x128xf32>
    tpu.vector_store %arg6[%141, %c0_52, %c0_53], %144 {strides = array<i32>} : memref<8x8x128xf32, #tpu.memory_space<vmem>>, vector<1x8x128xf32>,
    %c5_i32 = arith.constant 5 : i32
    %145 = arith.index_cast %c5_i32 : i32 to index
    %c0_54 = arith.constant 0 : index
    %c0_55 = arith.constant 0 : index
    %146 = vector.load %arg2[%145, %c0_54, %c0_55] : memref<8x8x512xf32, #tpu.memory_space<vmem>>, vector<1x8x512xf32>
    %147 = vector.shape_cast %146 : vector<1x8x512xf32> to vector<8x512xf32>
    %c0_56 = arith.constant 0 : index
    %c0_57 = arith.constant 0 : index
    %148 = vector.load %arg3[%c0_56, %c0_57] : memref<128x512xf32, #tpu.memory_space<vmem>>, vector<128x512xf32>
    %cst_58 = arith.constant dense<0.000000e+00> : vector<8x512xf32>
    %149 = tpu.matmul %140, %148, %cst_58 {dimension_numbers = #tpu.dot_dimension_numbers<[1], [0], [0], [1], [0, 0, 1, 1], [], []>} : vector<8x128xf32>, vector<128x512xf32>, vector<8x512xf32> -> vector<8x512xf32>
    %150 = arith.addf %147, %149 : vector<8x512xf32>
    %151 = vector.extract_strided_slice %150 {offsets = [0, 0], sizes = [8, 384], strides = [1, 1]} : vector<8x512xf32> to vector<8x384xf32>
    %cst_59 = arith.constant 5.000000e-01 : f32
    %152 = vector.broadcast %cst_59 : f32 to vector<8x384xf32>
    %153 = arith.mulf %152, %151 : vector<8x384xf32>
    %154 = math.tanh %153 : vector<8x384xf32>
    %cst_60 = arith.constant 5.000000e-01 : f32
    %155 = vector.broadcast %cst_60 : f32 to vector<8x384xf32>
    %156 = arith.mulf %155, %154 : vector<8x384xf32>
    %cst_61 = arith.constant 5.000000e-01 : f32
    %157 = vector.broadcast %cst_61 : f32 to vector<8x384xf32>
    %158 = arith.addf %156, %157 : vector<8x384xf32>
    %159 = vector.extract_strided_slice %158 {offsets = [0, 0], sizes = [8, 128], strides = [1, 1]} : vector<8x384xf32> to vector<8x128xf32>
    %160 = vector.extract_strided_slice %158 {offsets = [0, 128], sizes = [8, 128], strides = [1, 1]} : vector<8x384xf32> to vector<8x128xf32>
    %161 = vector.extract_strided_slice %158 {offsets = [0, 256], sizes = [8, 128], strides = [1, 1]} : vector<8x384xf32> to vector<8x128xf32>
    %162 = vector.extract_strided_slice %150 {offsets = [0, 384], sizes = [8, 128], strides = [1, 1]} : vector<8x512xf32> to vector<8x128xf32>
    %163 = math.tanh %162 : vector<8x128xf32>
    %164 = arith.mulf %160, %138 : vector<8x128xf32>
    %165 = arith.mulf %159, %163 : vector<8x128xf32>
    %166 = arith.addf %164, %165 : vector<8x128xf32>
    %167 = math.tanh %166 : vector<8x128xf32>
    %168 = arith.mulf %161, %167 : vector<8x128xf32>
    %169 = arith.index_cast %c5_i32 : i32 to index
    %c0_62 = arith.constant 0 : index
    %c0_63 = arith.constant 0 : index
    %170 = vector.load %arg6[%169, %c0_62, %c0_63] : memref<8x8x128xf32, #tpu.memory_space<vmem>>, vector<1x8x128xf32>
    %171 = vector.shape_cast %170 : vector<1x8x128xf32> to vector<8x128xf32>
    %172 = vector.shape_cast %168 : vector<8x128xf32> to vector<1x8x128xf32>
    tpu.vector_store %arg6[%169, %c0_62, %c0_63], %172 {strides = array<i32>} : memref<8x8x128xf32, #tpu.memory_space<vmem>>, vector<1x8x128xf32>,
    %c6_i32 = arith.constant 6 : i32
    %173 = arith.index_cast %c6_i32 : i32 to index
    %c0_64 = arith.constant 0 : index
    %c0_65 = arith.constant 0 : index
    %174 = vector.load %arg2[%173, %c0_64, %c0_65] : memref<8x8x512xf32, #tpu.memory_space<vmem>>, vector<1x8x512xf32>
    %175 = vector.shape_cast %174 : vector<1x8x512xf32> to vector<8x512xf32>
    %c0_66 = arith.constant 0 : index
    %c0_67 = arith.constant 0 : index
    %176 = vector.load %arg3[%c0_66, %c0_67] : memref<128x512xf32, #tpu.memory_space<vmem>>, vector<128x512xf32>
    %cst_68 = arith.constant dense<0.000000e+00> : vector<8x512xf32>
    %177 = tpu.matmul %168, %176, %cst_68 {dimension_numbers = #tpu.dot_dimension_numbers<[1], [0], [0], [1], [0, 0, 1, 1], [], []>} : vector<8x128xf32>, vector<128x512xf32>, vector<8x512xf32> -> vector<8x512xf32>
    %178 = arith.addf %175, %177 : vector<8x512xf32>
    %179 = vector.extract_strided_slice %178 {offsets = [0, 0], sizes = [8, 384], strides = [1, 1]} : vector<8x512xf32> to vector<8x384xf32>
    %cst_69 = arith.constant 5.000000e-01 : f32
    %180 = vector.broadcast %cst_69 : f32 to vector<8x384xf32>
    %181 = arith.mulf %180, %179 : vector<8x384xf32>
    %182 = math.tanh %181 : vector<8x384xf32>
    %cst_70 = arith.constant 5.000000e-01 : f32
    %183 = vector.broadcast %cst_70 : f32 to vector<8x384xf32>
    %184 = arith.mulf %183, %182 : vector<8x384xf32>
    %cst_71 = arith.constant 5.000000e-01 : f32
    %185 = vector.broadcast %cst_71 : f32 to vector<8x384xf32>
    %186 = arith.addf %184, %185 : vector<8x384xf32>
    %187 = vector.extract_strided_slice %186 {offsets = [0, 0], sizes = [8, 128], strides = [1, 1]} : vector<8x384xf32> to vector<8x128xf32>
    %188 = vector.extract_strided_slice %186 {offsets = [0, 128], sizes = [8, 128], strides = [1, 1]} : vector<8x384xf32> to vector<8x128xf32>
    %189 = vector.extract_strided_slice %186 {offsets = [0, 256], sizes = [8, 128], strides = [1, 1]} : vector<8x384xf32> to vector<8x128xf32>
    %190 = vector.extract_strided_slice %178 {offsets = [0, 384], sizes = [8, 128], strides = [1, 1]} : vector<8x512xf32> to vector<8x128xf32>
    %191 = math.tanh %190 : vector<8x128xf32>
    %192 = arith.mulf %188, %166 : vector<8x128xf32>
    %193 = arith.mulf %187, %191 : vector<8x128xf32>
    %194 = arith.addf %192, %193 : vector<8x128xf32>
    %195 = math.tanh %194 : vector<8x128xf32>
    %196 = arith.mulf %189, %195 : vector<8x128xf32>
    %197 = arith.index_cast %c6_i32 : i32 to index
    %c0_72 = arith.constant 0 : index
    %c0_73 = arith.constant 0 : index
    %198 = vector.load %arg6[%197, %c0_72, %c0_73] : memref<8x8x128xf32, #tpu.memory_space<vmem>>, vector<1x8x128xf32>
    %199 = vector.shape_cast %198 : vector<1x8x128xf32> to vector<8x128xf32>
    %200 = vector.shape_cast %196 : vector<8x128xf32> to vector<1x8x128xf32>
    tpu.vector_store %arg6[%197, %c0_72, %c0_73], %200 {strides = array<i32>} : memref<8x8x128xf32, #tpu.memory_space<vmem>>, vector<1x8x128xf32>,
    %c7_i32 = arith.constant 7 : i32
    %201 = arith.index_cast %c7_i32 : i32 to index
    %c0_74 = arith.constant 0 : index
    %c0_75 = arith.constant 0 : index
    %202 = vector.load %arg2[%201, %c0_74, %c0_75] : memref<8x8x512xf32, #tpu.memory_space<vmem>>, vector<1x8x512xf32>
    %203 = vector.shape_cast %202 : vector<1x8x512xf32> to vector<8x512xf32>
    %c0_76 = arith.constant 0 : index
    %c0_77 = arith.constant 0 : index
    %204 = vector.load %arg3[%c0_76, %c0_77] : memref<128x512xf32, #tpu.memory_space<vmem>>, vector<128x512xf32>
    %cst_78 = arith.constant dense<0.000000e+00> : vector<8x512xf32>
    %205 = tpu.matmul %196, %204, %cst_78 {dimension_numbers = #tpu.dot_dimension_numbers<[1], [0], [0], [1], [0, 0, 1, 1], [], []>} : vector<8x128xf32>, vector<128x512xf32>, vector<8x512xf32> -> vector<8x512xf32>
    %206 = arith.addf %203, %205 : vector<8x512xf32>
    %207 = vector.extract_strided_slice %206 {offsets = [0, 0], sizes = [8, 384], strides = [1, 1]} : vector<8x512xf32> to vector<8x384xf32>
    %cst_79 = arith.constant 5.000000e-01 : f32
    %208 = vector.broadcast %cst_79 : f32 to vector<8x384xf32>
    %209 = arith.mulf %208, %207 : vector<8x384xf32>
    %210 = math.tanh %209 : vector<8x384xf32>
    %cst_80 = arith.constant 5.000000e-01 : f32
    %211 = vector.broadcast %cst_80 : f32 to vector<8x384xf32>
    %212 = arith.mulf %211, %210 : vector<8x384xf32>
    %cst_81 = arith.constant 5.000000e-01 : f32
    %213 = vector.broadcast %cst_81 : f32 to vector<8x384xf32>
    %214 = arith.addf %212, %213 : vector<8x384xf32>
    %215 = vector.extract_strided_slice %214 {offsets = [0, 0], sizes = [8, 128], strides = [1, 1]} : vector<8x384xf32> to vector<8x128xf32>
    %216 = vector.extract_strided_slice %214 {offsets = [0, 128], sizes = [8, 128], strides = [1, 1]} : vector<8x384xf32> to vector<8x128xf32>
    %217 = vector.extract_strided_slice %214 {offsets = [0, 256], sizes = [8, 128], strides = [1, 1]} : vector<8x384xf32> to vector<8x128xf32>
    %218 = vector.extract_strided_slice %206 {offsets = [0, 384], sizes = [8, 128], strides = [1, 1]} : vector<8x512xf32> to vector<8x128xf32>
    %219 = math.tanh %218 : vector<8x128xf32>
    %220 = arith.mulf %216, %194 : vector<8x128xf32>
    %221 = arith.mulf %215, %219 : vector<8x128xf32>
    %222 = arith.addf %220, %221 : vector<8x128xf32>
    %223 = math.tanh %222 : vector<8x128xf32>
    %224 = arith.mulf %217, %223 : vector<8x128xf32>
    %225 = arith.index_cast %c7_i32 : i32 to index
    %c0_82 = arith.constant 0 : index
    %c0_83 = arith.constant 0 : index
    %226 = vector.load %arg6[%225, %c0_82, %c0_83] : memref<8x8x128xf32, #tpu.memory_space<vmem>>, vector<1x8x128xf32>
    %227 = vector.shape_cast %226 : vector<1x8x128xf32> to vector<8x128xf32>
    %228 = vector.shape_cast %224 : vector<8x128xf32> to vector<1x8x128xf32>
    tpu.vector_store %arg6[%225, %c0_82, %c0_83], %228 {strides = array<i32>} : memref<8x8x128xf32, #tpu.memory_space<vmem>>, vector<1x8x128xf32>,
    %c8_i32 = arith.constant 8 : i32
    %c0_84 = arith.constant 0 : index
    %c0_85 = arith.constant 0 : index
    %229 = vector.load %arg8[%c0_84, %c0_85] : memref<8x128xf32, #tpu.memory_space<vmem>>, vector<8x128xf32>
    tpu.vector_store %arg8[%c0_84, %c0_85], %224 {strides = array<i32>} : memref<8x128xf32, #tpu.memory_space<vmem>>, vector<8x128xf32>,
    %c0_86 = arith.constant 0 : index
    %c0_87 = arith.constant 0 : index
    %230 = vector.load %arg9[%c0_86, %c0_87] : memref<8x128xf32, #tpu.memory_space<vmem>>, vector<8x128xf32>
    tpu.vector_store %arg9[%c0_86, %c0_87], %222 {strides = array<i32>} : memref<8x128xf32, #tpu.memory_space<vmem>>, vector<8x128xf32>,
    %c0_i32_88 = arith.constant 0 : i32
    %231 = arith.cmpi eq, %arg1, %c0_i32_88 : i32
    %232 = arith.extui %231 : i1 to i32
    %c0_i32_89 = arith.constant 0 : i32
    %233 = arith.cmpi ne, %232, %c0_i32_89 : i32
    scf.if %233 {
      %c0_90 = arith.constant 0 : index
      %c0_91 = arith.constant 0 : index
      %234 = vector.load %arg7[%c0_90, %c0_91] : memref<8x128xf32, #tpu.memory_space<vmem>>, vector<8x128xf32>
      tpu.vector_store %arg7[%c0_90, %c0_91], %222 {strides = array<i32>} : memref<8x128xf32, #tpu.memory_space<vmem>>, vector<8x128xf32>,
    } else {
    }
    return
  }
  func.func @transform_0(%arg0: i32, %arg1: i32) -> (i32, i32, i32) {
    %c0_i32 = arith.constant 0 : i32
    %c0_i32_0 = arith.constant 0 : i32
    return %arg1, %arg0, %c0_i32 : i32, i32, i32
  }
  func.func @transform_1(%arg0: i32, %arg1: i32) -> (i32, i32) {
    %c0_i32 = arith.constant 0 : i32
    %c0_i32_0 = arith.constant 0 : i32
    %c0_i32_1 = arith.constant 0 : i32
    return %c0_i32, %c0_i32_0 : i32, i32
  }
  func.func @transform_2(%arg0: i32, %arg1: i32) -> (i32, i32) {
    %c0_i32 = arith.constant 0 : i32
    %c0_i32_0 = arith.constant 0 : i32
    return %arg0, %c0_i32 : i32, i32
  }
  func.func @transform_3(%arg0: i32, %arg1: i32) -> (i32, i32) {
    %c0_i32 = arith.constant 0 : i32
    %c0_i32_0 = arith.constant 0 : i32
    return %arg0, %c0_i32 : i32, i32
  }
  func.func @transform_4(%arg0: i32, %arg1: i32) -> (i32, i32, i32) {
    %c0_i32 = arith.constant 0 : i32
    %c0_i32_0 = arith.constant 0 : i32
    return %arg1, %arg0, %c0_i32 : i32, i32, i32
  }
  func.func @transform_5(%arg0: i32, %arg1: i32) -> (i32, i32) {
    %c0_i32 = arith.constant 0 : i32
    %c0_i32_0 = arith.constant 0 : i32
    return %arg0, %c0_i32 : i32, i32
  }
}

</mosaic_0001>

<llo_original>
// kernel: lstm_forward.1
$region0: #{lstm_forward.1}
  #allocation0 [shape = 'u32[]', space=smem, size = 0x4, offset = 0x4, fixed_abs, tag = 'smem constant byte address 0x4 - core index']
  #allocation1 [shape = 'u32[144,128]{1,0:T(1,128)}', space=vmem, size = 0x12000, scoped, tag = 'internal scratch']
  #allocation2 [shape = 'f32[8,128]{1,0:T(8,128)}', space=vmem, size = 0x1000, scoped, tag = 'scratch operand']
  #allocation3 [shape = 'f32[8,128]{1,0:T(8,128)}', space=vmem, size = 0x1000, scoped, tag = 'scratch operand']
  %s0 = inlined_call_operand.vmem [shape: f32[8,8,512], index: 0, kind: input, shape index: {}]
  %s1 = inlined_call_operand.vmem [shape: f32[128,512], index: 1, kind: input, shape index: {}]
  %s2 = inlined_call_operand.vmem [shape: f32[8,128], index: 2, kind: input, shape index: {}]
  %s3 = inlined_call_operand.vmem [shape: f32[8,128], index: 3, kind: input, shape index: {}]
  %s4 = inlined_call_operand.vmem [shape: f32[8,8,128], index: 4, kind: output, shape index: {0}]
  %s5 = inlined_call_operand.vmem [shape: f32[8,128], index: 5, kind: output, shape index: {1}]
  %6 = xla_tuple %s4, %s5
  %s7 = sld [smem:[#allocation0]]
  $region42: #{lstm_forward.1} parent=0
    _
  %s9 = ssub.s32 1, %s7
  %s10 = scalar_select 0, %s9, %s7
  // Predicated region
  $region2: #{lstm_forward.1} parent=0 // pred_check
    _
  $region3: #{lstm_forward.1} parent=0 // pred_check_branch
    %12 = sbr.rel (0) target = $region5
  $region4: #{lstm_forward.1} parent=0 // pred_region
    _
  $region5: #{lstm_forward.1} parent=0 // pred_fallthru
    _
  // Predicated region
  $region6: #{lstm_forward.1} parent=0 // pred_check
    _
  $region7: #{lstm_forward.1} parent=0 // pred_check_branch
    %14 = sbr.rel (0) target = $region9
  $region8: #{lstm_forward.1} parent=0 // pred_region
    _
  $region9: #{lstm_forward.1} parent=0 // pred_fallthru
    _
  // Predicated region
  $region10: #{lstm_forward.1} parent=0 // pred_check
    _
  $region11: #{lstm_forward.1} parent=0 // pred_check_branch
    %16 = sbr.rel (0) target = $region13
  $region12: #{lstm_forward.1} parent=0 // pred_region
    _
  $region13: #{lstm_forward.1} parent=0 // pred_fallthru
    _
  // Predicated region
  $region14: #{lstm_forward.1} parent=0 // pred_check
    _
  $region15: #{lstm_forward.1} parent=0 // pred_check_branch
    %18 = sbr.rel (0) target = $region17
  $region16: #{lstm_forward.1} parent=0 // pred_region
    _
  $region17: #{lstm_forward.1} parent=0 // pred_fallthru
    _
  %p19 = scmp.eq.s32.totalorder 0, 0
  // Predicated region
  $region18: #{lstm_forward.1} parent=0 // pred_check
    %p20 = pneg %p19
  $region19: #{lstm_forward.1} parent=0 // pred_check_branch
    %22 = sbr.rel (%p20) target = $region21
  $region20: #{lstm_forward.1} parent=0 // pred_region
    %v23 = vld [vmem:[%s2] sm:$0xff]
    %24 = vst [vmem:[#allocation2] sm:$0xff] %v23
    %v25 = vld [vmem:[%s3] sm:$0xff]
    %26 = vst [vmem:[#allocation3] sm:$0xff] %v25
  $region21: #{lstm_forward.1} parent=0 // pred_fallthru
    _
  %v27 = vld [vmem:[#allocation2] sm:$0xff]
  %v28 = vld [vmem:[#allocation3] sm:$0xff]
  %v29 = vld [vmem:[%s0] sm:$0xff]
  %v30 = vld [vmem:[%s0 + $0x8] sm:$0xff]
  %v31 = vld [vmem:[%s0 + $0x10] sm:$0xff]
  %v32 = vld [vmem:[%s0 + $0x18] sm:$0xff]
  %v33 = vld [vmem:[%s1] sm:$0xff]
  %v34 = vld [vmem:[%s1 + $0x8] sm:$0xff]
  %v35 = vld [vmem:[%s1 + $0x10] sm:$0xff]
  %v36 = vld [vmem:[%s1 + $0x18] sm:$0xff]
  %v37 = vld [vmem:[%s1 + $0x20] sm:$0xff]
  %v38 = vld [vmem:[%s1 + $0x28] sm:$0xff]
  %v39 = vld [vmem:[%s1 + $0x30] sm:$0xff]
  %v40 = vld [vmem:[%s1 + $0x38] sm:$0xff]
  %v41 = vld [vmem:[%s1 + $0x40] sm:$0xff]
  %v42 = vld [vmem:[%s1 + $0x48] sm:$0xff]
  %v43 = vld [vmem:[%s1 + $0x50] sm:$0xff]
  %v44 = vld [vmem:[%s1 + $0x58] sm:$0xff]
  %v45 = vld [vmem:[%s1 + $0x60] sm:$0xff]
  %v46 = vld [vmem:[%s1 + $0x68] sm:$0xff]
  %v47 = vld [vmem:[%s1 + $0x70] sm:$0xff]
  %v48 = vld [vmem:[%s1 + $0x78] sm:$0xff]
  %v49 = vld [vmem:[%s1 + $0x80] sm:$0xff]
  %v50 = vld [vmem:[%s1 + $0x88] sm:$0xff]
  %v51 = vld [vmem:[%s1 + $0x90] sm:$0xff]
  %v52 = vld [vmem:[%s1 + $0x98] sm:$0xff]
  %v53 = vld [vmem:[%s1 + $0xa0] sm:$0xff]
  %v54 = vld [vmem:[%s1 + $0xa8] sm:$0xff]
  %v55 = vld [vmem:[%s1 + $0xb0] sm:$0xff]
  %v56 = vld [vmem:[%s1 + $0xb8] sm:$0xff]
  %v57 = vld [vmem:[%s1 + $0xc0] sm:$0xff]
  %v58 = vld [vmem:[%s1 + $0xc8] sm:$0xff]
  %v59 = vld [vmem:[%s1 + $0xd0] sm:$0xff]
  %v60 = vld [vmem:[%s1 + $0xd8] sm:$0xff]
  %v61 = vld [vmem:[%s1 + $0xe0] sm:$0xff]
  %v62 = vld [vmem:[%s1 + $0xe8] sm:$0xff]
  %v63 = vld [vmem:[%s1 + $0xf0] sm:$0xff]
  %v64 = vld [vmem:[%s1 + $0xf8] sm:$0xff]
  %v65 = vld [vmem:[%s1 + $0x100] sm:$0xff]
  %v66 = vld [vmem:[%s1 + $0x108] sm:$0xff]
  %v67 = vld [vmem:[%s1 + $0x110] sm:$0xff]
  %v68 = vld [vmem:[%s1 + $0x118] sm:$0xff]
  %v69 = vld [vmem:[%s1 + $0x120] sm:$0xff]
  %v70 = vld [vmem:[%s1 + $0x128] sm:$0xff]
  %v71 = vld [vmem:[%s1 + $0x130] sm:$0xff]
  %v72 = vld [vmem:[%s1 + $0x138] sm:$0xff]
  %v73 = vld [vmem:[%s1 + $0x140] sm:$0xff]
  %v74 = vld [vmem:[%s1 + $0x148] sm:$0xff]
  %v75 = vld [vmem:[%s1 + $0x150] sm:$0xff]
  %v76 = vld [vmem:[%s1 + $0x158] sm:$0xff]
  %v77 = vld [vmem:[%s1 + $0x160] sm:$0xff]
  %v78 = vld [vmem:[%s1 + $0x168] sm:$0xff]
  %v79 = vld [vmem:[%s1 + $0x170] sm:$0xff]
  %v80 = vld [vmem:[%s1 + $0x178] sm:$0xff]
  %v81 = vld [vmem:[%s1 + $0x180] sm:$0xff]
  %v82 = vld [vmem:[%s1 + $0x188] sm:$0xff]
  %v83 = vld [vmem:[%s1 + $0x190] sm:$0xff]
  %v84 = vld [vmem:[%s1 + $0x198] sm:$0xff]
  %v85 = vld [vmem:[%s1 + $0x1a0] sm:$0xff]
  %v86 = vld [vmem:[%s1 + $0x1a8] sm:$0xff]
  %v87 = vld [vmem:[%s1 + $0x1b0] sm:$0xff]
  %v88 = vld [vmem:[%s1 + $0x1b8] sm:$0xff]
  %v89 = vld [vmem:[%s1 + $0x1c0] sm:$0xff]
  %v90 = vld [vmem:[%s1 + $0x1c8] sm:$0xff]
  %v91 = vld [vmem:[%s1 + $0x1d0] sm:$0xff]
  %v92 = vld [vmem:[%s1 + $0x1d8] sm:$0xff]
  %v93 = vld [vmem:[%s1 + $0x1e0] sm:$0xff]
  %v94 = vld [vmem:[%s1 + $0x1e8] sm:$0xff]
  %v95 = vld [vmem:[%s1 + $0x1f0] sm:$0xff]
  %v96 = vld [vmem:[%s1 + $0x1f8] sm:$0xff]
  %97 = vmatprep.subr.mxu0 %v34
  %98 = vmatpush1.msra.mxu0 %v33
  %99 = vmatprep.subr.mxu0 %v38
  %100 = vmatpush1.msra.mxu0 %v37
  %101 = vmatprep.subr.mxu0 %v42
  %102 = vmatpush1.msra.mxu0 %v41
  %103 = vmatprep.subr.mxu0 %v46
  %104 = vmatpush1.msra.mxu0 %v45
  %105 = vmatprep.subr.mxu0 %v50
  %106 = vmatpush1.msra.mxu0 %v49
  %107 = vmatprep.subr.mxu0 %v54
  %108 = vmatpush1.msra.mxu0 %v53
  %109 = vmatprep.subr.mxu0 %v58
  %110 = vmatpush1.msra.mxu0 %v57
  %111 = vmatprep.subr.mxu0 %v62
  %112 = vmatpush1.msra.mxu0 %v61
  %113 = vmatprep.subr.mxu0 %v66
  %114 = vmatpush1.msra.mxu0 %v65
  %115 = vmatprep.subr.mxu0 %v70
  %116 = vmatpush1.msra.mxu0 %v69
  %117 = vmatprep.subr.mxu0 %v74
  %118 = vmatpush1.msra.mxu0 %v73
  %119 = vmatprep.subr.mxu0 %v78
  %120 = vmatpush1.msra.mxu0 %v77
  %121 = vmatprep.subr.mxu0 %v82
  %122 = vmatpush1.msra.mxu0 %v81
  %123 = vmatprep.subr.mxu0 %v86
  %124 = vmatpush1.msra.mxu0 %v85
  %125 = vmatprep.subr.mxu0 %v90
  %126 = vmatpush1.msra.mxu0 %v89
  %127 = vmatprep.subr.mxu0 %v94
  %128 = vmatpush1.msra.mxu0 %v93
  %129 = vmatprep.subr.mxu0 0.0
  %130 = vmatpush1.msra.mxu0 0.0
  %131 = vmatprep.subr.mxu0 0.0
  %132 = vmatpush1.msra.mxu0 0.0
  %133 = vmatprep.subr.mxu0 0.0
  %134 = vmatpush1.msra.mxu0 0.0
  %135 = vmatprep.subr.mxu0 0.0
  %136 = vmatpush1.msra.mxu0 0.0
  %137 = vmatprep.subr.mxu0 0.0
  %138 = vmatpush1.msra.mxu0 0.0
  %139 = vmatprep.subr.mxu0 0.0
  %140 = vmatpush1.msra.mxu0 0.0
  %141 = vmatprep.subr.mxu0 0.0
  %142 = vmatpush1.msra.mxu0 0.0
  %143 = vmatprep.subr.mxu0 0.0
  %144 = vmatpush1.msra.mxu0 0.0
  %145 = vmatprep.subr.mxu0 0.0
  %146 = vmatpush1.msra.mxu0 0.0
  %147 = vmatprep.subr.mxu0 0.0
  %148 = vmatpush1.msra.mxu0 0.0
  %149 = vmatprep.subr.mxu0 0.0
  %150 = vmatpush1.msra.mxu0 0.0
  %151 = vmatprep.subr.mxu0 0.0
  %152 = vmatpush1.msra.mxu0 0.0
  %153 = vmatprep.subr.mxu0 0.0
  %154 = vmatpush1.msra.mxu0 0.0
  %155 = vmatprep.subr.mxu0 0.0
  %156 = vmatpush1.msra.mxu0 0.0
  %157 = vmatprep.subr.mxu0 0.0
  %158 = vmatpush1.msra.mxu0 0.0
  %159 = vmatprep.subr.mxu0 0.0
  %160 = vmatpush1.msra.mxu0 0.0
  %161 = vmatprep.mubr.f32.mxu0 0.0
  %162 = vmatmul.mubr.f32.gmra.mrb[0].mxu0 %v27
  %v163 = vpop.f32.mrb[0].mxu0
  %v164 = vadd.f32 0.0, %v163
  %v165 = vpop.f32.mrb[0].mxu0
  %v166 = vadd.f32 0.0, %v165
  %167 = vdwg.mxu0
  %168 = vmatprep.subr.mxu0 %v36
  %169 = vmatpush1.msra.mxu0 %v35
  %170 = vmatprep.subr.mxu0 %v40
  %171 = vmatpush1.msra.mxu0 %v39
  %172 = vmatprep.subr.mxu0 %v44
  %173 = vmatpush1.msra.mxu0 %v43
  %174 = vmatprep.subr.mxu0 %v48
  %175 = vmatpush1.msra.mxu0 %v47
  %176 = vmatprep.subr.mxu0 %v52
  %177 = vmatpush1.msra.mxu0 %v51
  %178 = vmatprep.subr.mxu0 %v56
  %179 = vmatpush1.msra.mxu0 %v55
  %180 = vmatprep.subr.mxu0 %v60
  %181 = vmatpush1.msra.mxu0 %v59
  %182 = vmatprep.subr.mxu0 %v64
  %183 = vmatpush1.msra.mxu0 %v63
  %184 = vmatprep.subr.mxu0 %v68
  %185 = vmatpush1.msra.mxu0 %v67
  %186 = vmatprep.subr.mxu0 %v72
  %187 = vmatpush1.msra.mxu0 %v71
  %188 = vmatprep.subr.mxu0 %v76
  %189 = vmatpush1.msra.mxu0 %v75
  %190 = vmatprep.subr.mxu0 %v80
  %191 = vmatpush1.msra.mxu0 %v79
  %192 = vmatprep.subr.mxu0 %v84
  %193 = vmatpush1.msra.mxu0 %v83
  %194 = vmatprep.subr.mxu0 %v88
  %195 = vmatpush1.msra.mxu0 %v87
  %196 = vmatprep.subr.mxu0 %v92
  %197 = vmatpush1.msra.mxu0 %v91
  %198 = vmatprep.subr.mxu0 %v96
  %199 = vmatpush1.msra.mxu0 %v95
  %200 = vmatprep.subr.mxu0 0.0
  %201 = vmatpush1.msra.mxu0 0.0
  %202 = vmatprep.subr.mxu0 0.0
  %203 = vmatpush1.msra.mxu0 0.0
  %204 = vmatprep.subr.mxu0 0.0
  %205 = vmatpush1.msra.mxu0 0.0
  %206 = vmatprep.subr.mxu0 0.0
  %207 = vmatpush1.msra.mxu0 0.0
  %208 = vmatprep.subr.mxu0 0.0
  %209 = vmatpush1.msra.mxu0 0.0
  %210 = vmatprep.subr.mxu0 0.0
  %211 = vmatpush1.msra.mxu0 0.0
  %212 = vmatprep.subr.mxu0 0.0
  %213 = vmatpush1.msra.mxu0 0.0
  %214 = vmatprep.subr.mxu0 0.0
  %215 = vmatpush1.msra.mxu0 0.0
  %216 = vmatprep.subr.mxu0 0.0
  %217 = vmatpush1.msra.mxu0 0.0
  %218 = vmatprep.subr.mxu0 0.0
  %219 = vmatpush1.msra.mxu0 0.0
  %220 = vmatprep.subr.mxu0 0.0
  %221 = vmatpush1.msra.mxu0 0.0
  %222 = vmatprep.subr.mxu0 0.0
  %223 = vmatpush1.msra.mxu0 0.0
  %224 = vmatprep.subr.mxu0 0.0
  %225 = vmatpush1.msra.mxu0 0.0
  %226 = vmatprep.subr.mxu0 0.0
  %227 = vmatpush1.msra.mxu0 0.0
  %228 = vmatprep.subr.mxu0 0.0
  %229 = vmatpush1.msra.mxu0 0.0
  %230 = vmatprep.subr.mxu0 0.0
  %231 = vmatpush1.msra.mxu0 0.0
  %232 = vmatprep.mubr.f32.mxu0 0.0
  %233 = vmatmul.mubr.f32.gmra.mrb[0].mxu0 %v27
  %v234 = vpop.f32.mrb[0].mxu0
  %v235 = vadd.f32 0.0, %v234
  %v236 = vpop.f32.mrb[0].mxu0
  %v237 = vadd.f32 0.0, %v236
  %238 = vdwg.mxu0
  %v239 = vadd.f32 %v29, %v164
  %v240 = vadd.f32 %v30, %v166
  %v241 = vadd.f32 %v31, %v235
  %v242 = vadd.f32 %v32, %v237
  %v243 = vmul.f32 %v239, 0.5
  %v244 = vmul.f32 %v240, 0.5
  %v245 = vmul.f32 %v241, 0.5
  %v246 = vtanh.pop %v243
  %v247 = vtanh.pop %v244
  %v248 = vtanh.pop %v245
  %v249 = vmul.f32 %v246, 0.5
  %v250 = vmul.f32 %v247, 0.5
  %v251 = vmul.f32 %v248, 0.5
  %v252 = vadd.f32 %v249, 0.5
  %v253 = vadd.f32 %v250, 0.5
  %v254 = vadd.f32 %v251, 0.5
  %v255 = vtanh.pop %v242
  %v256 = vmul.f32 %v253, %v28
  %v257 = vmul.f32 %v252, %v255
  %v258 = vadd.f32 %v256, %v257
  %v259 = vtanh.pop %v258
  %v260 = vmul.f32 %v254, %v259
  %261 = vst [vmem:[%s4] sm:$0xff] %v260
  %s262 = scalar_lea.vmem %s0, 32
  %v263 = vld [vmem:[%s262] sm:$0xff]
  %v264 = vld [vmem:[%s262 + $0x8] sm:$0xff]
  %v265 = vld [vmem:[%s262 + $0x10] sm:$0xff]
  %v266 = vld [vmem:[%s262 + $0x18] sm:$0xff]
  %v267 = vld [vmem:[%s1] sm:$0xff]
  %v268 = vld [vmem:[%s1 + $0x8] sm:$0xff]
  %v269 = vld [vmem:[%s1 + $0x10] sm:$0xff]
  %v270 = vld [vmem:[%s1 + $0x18] sm:$0xff]
  %v271 = vld [vmem:[%s1 + $0x20] sm:$0xff]
  %v272 = vld [vmem:[%s1 + $0x28] sm:$0xff]
  %v273 = vld [vmem:[%s1 + $0x30] sm:$0xff]
  %v274 = vld [vmem:[%s1 + $0x38] sm:$0xff]
  %v275 = vld [vmem:[%s1 + $0x40] sm:$0xff]
  %v276 = vld [vmem:[%s1 + $0x48] sm:$0xff]
  %v277 = vld [vmem:[%s1 + $0x50] sm:$0xff]
  %v278 = vld [vmem:[%s1 + $0x58] sm:$0xff]
  %v279 = vld [vmem:[%s1 + $0x60] sm:$0xff]
  %v280 = vld [vmem:[%s1 + $0x68] sm:$0xff]
  %v281 = vld [vmem:[%s1 + $0x70] sm:$0xff]
  %v282 = vld [vmem:[%s1 + $0x78] sm:$0xff]
  %v283 = vld [vmem:[%s1 + $0x80] sm:$0xff]
  %v284 = vld [vmem:[%s1 + $0x88] sm:$0xff]
  %v285 = vld [vmem:[%s1 + $0x90] sm:$0xff]
  %v286 = vld [vmem:[%s1 + $0x98] sm:$0xff]
  %v287 = vld [vmem:[%s1 + $0xa0] sm:$0xff]
  %v288 = vld [vmem:[%s1 + $0xa8] sm:$0xff]
  %v289 = vld [vmem:[%s1 + $0xb0] sm:$0xff]
  %v290 = vld [vmem:[%s1 + $0xb8] sm:$0xff]
  %v291 = vld [vmem:[%s1 + $0xc0] sm:$0xff]
  %v292 = vld [vmem:[%s1 + $0xc8] sm:$0xff]
  %v293 = vld [vmem:[%s1 + $0xd0] sm:$0xff]
  %v294 = vld [vmem:[%s1 + $0xd8] sm:$0xff]
  %v295 = vld [vmem:[%s1 + $0xe0] sm:$0xff]
  %v296 = vld [vmem:[%s1 + $0xe8] sm:$0xff]
  %v297 = vld [vmem:[%s1 + $0xf0] sm:$0xff]
  %v298 = vld [vmem:[%s1 + $0xf8] sm:$0xff]
  %v299 = vld [vmem:[%s1 + $0x100] sm:$0xff]
  %v300 = vld [vmem:[%s1 + $0x108] sm:$0xff]
  %v301 = vld [vmem:[%s1 + $0x110] sm:$0xff]
  %v302 = vld [vmem:[%s1 + $0x118] sm:$0xff]
  %v303 = vld [vmem:[%s1 + $0x120] sm:$0xff]
  %v304 = vld [vmem:[%s1 + $0x128] sm:$0xff]
  %v305 = vld [vmem:[%s1 + $0x130] sm:$0xff]
  %v306 = vld [vmem:[%s1 + $0x138] sm:$0xff]
  %v307 = vld [vmem:[%s1 + $0x140] sm:$0xff]
  %v308 = vld [vmem:[%s1 + $0x148] sm:$0xff]
  %v309 = vld [vmem:[%s1 + $0x150] sm:$0xff]
  %v310 = vld [vmem:[%s1 + $0x158] sm:$0xff]
  %v311 = vld [vmem:[%s1 + $0x160] sm:$0xff]
  %v312 = vld [vmem:[%s1 + $0x168] sm:$0xff]
  %v313 = vld [vmem:[%s1 + $0x170] sm:$0xff]
  %v314 = vld [vmem:[%s1 + $0x178] sm:$0xff]
  %v315 = vld [vmem:[%s1 + $0x180] sm:$0xff]
  %v316 = vld [vmem:[%s1 + $0x188] sm:$0xff]
  %v317 = vld [vmem:[%s1 + $0x190] sm:$0xff]
  %v318 = vld [vmem:[%s1 + $0x198] sm:$0xff]
  %v319 = vld [vmem:[%s1 + $0x1a0] sm:$0xff]
  %v320 = vld [vmem:[%s1 + $0x1a8] sm:$0xff]
  %v321 = vld [vmem:[%s1 + $0x1b0] sm:$0xff]
  %v322 = vld [vmem:[%s1 + $0x1b8] sm:$0xff]
  %v323 = vld [vmem:[%s1 + $0x1c0] sm:$0xff]
  %v324 = vld [vmem:[%s1 + $0x1c8] sm:$0xff]
  %v325 = vld [vmem:[%s1 + $0x1d0] sm:$0xff]
  %v326 = vld [vmem:[%s1 + $0x1d8] sm:$0xff]
  %v327 = vld [vmem:[%s1 + $0x1e0] sm:$0xff]
  %v328 = vld [vmem:[%s1 + $0x1e8] sm:$0xff]
  %v329 = vld [vmem:[%s1 + $0x1f0] sm:$0xff]
  %v330 = vld [vmem:[%s1 + $0x1f8] sm:$0xff]
  %331 = vmatprep.subr.mxu0 %v268
  %332 = vmatpush1.msra.mxu0 %v267
  %333 = vmatprep.subr.mxu0 %v272
  %334 = vmatpush1.msra.mxu0 %v271
  %335 = vmatprep.subr.mxu0 %v276
  %336 = vmatpush1.msra.mxu0 %v275
  %337 = vmatprep.subr.mxu0 %v280
  %338 = vmatpush1.msra.mxu0 %v279
  %339 = vmatprep.subr.mxu0 %v284
  %340 = vmatpush1.msra.mxu0 %v283
  %341 = vmatprep.subr.mxu0 %v288
  %342 = vmatpush1.msra.mxu0 %v287
  %343 = vmatprep.subr.mxu0 %v292
  %344 = vmatpush1.msra.mxu0 %v291
  %345 = vmatprep.subr.mxu0 %v296
  %346 = vmatpush1.msra.mxu0 %v295
  %347 = vmatprep.subr.mxu0 %v300
  %348 = vmatpush1.msra.mxu0 %v299
  %349 = vmatprep.subr.mxu0 %v304
  %350 = vmatpush1.msra.mxu0 %v303
  %351 = vmatprep.subr.mxu0 %v308
  %352 = vmatpush1.msra.mxu0 %v307
  %353 = vmatprep.subr.mxu0 %v312
  %354 = vmatpush1.msra.mxu0 %v311
  %355 = vmatprep.subr.mxu0 %v316
  %356 = vmatpush1.msra.mxu0 %v315
  %357 = vmatprep.subr.mxu0 %v320
  %358 = vmatpush1.msra.mxu0 %v319
  %359 = vmatprep.subr.mxu0 %v324
  %360 = vmatpush1.msra.mxu0 %v323
  %361 = vmatprep.subr.mxu0 %v328
  %362 = vmatpush1.msra.mxu0 %v327
  %363 = vmatprep.subr.mxu0 0.0
  %364 = vmatpush1.msra.mxu0 0.0
  %365 = vmatprep.subr.mxu0 0.0
  %366 = vmatpush1.msra.mxu0 0.0
  %367 = vmatprep.subr.mxu0 0.0
  %368 = vmatpush1.msra.mxu0 0.0
  %369 = vmatprep.subr.mxu0 0.0
  %370 = vmatpush1.msra.mxu0 0.0
  %371 = vmatprep.subr.mxu0 0.0
  %372 = vmatpush1.msra.mxu0 0.0
  %373 = vmatprep.subr.mxu0 0.0
  %374 = vmatpush1.msra.mxu0 0.0
  %375 = vmatprep.subr.mxu0 0.0
  %376 = vmatpush1.msra.mxu0 0.0
  %377 = vmatprep.subr.mxu0 0.0
  %378 = vmatpush1.msra.mxu0 0.0
  %379 = vmatprep.subr.mxu0 0.0
  %380 = vmatpush1.msra.mxu0 0.0
  %381 = vmatprep.subr.mxu0 0.0
  %382 = vmatpush1.msra.mxu0 0.0
  %383 = vmatprep.subr.mxu0 0.0
  %384 = vmatpush1.msra.mxu0 0.0
  %385 = vmatprep.subr.mxu0 0.0
  %386 = vmatpush1.msra.mxu0 0.0
  %387 = vmatprep.subr.mxu0 0.0
  %388 = vmatpush1.msra.mxu0 0.0
  %389 = vmatprep.subr.mxu0 0.0
  %390 = vmatpush1.msra.mxu0 0.0
  %391 = vmatprep.subr.mxu0 0.0
  %392 = vmatpush1.msra.mxu0 0.0
  %393 = vmatprep.subr.mxu0 0.0
  %394 = vmatpush1.msra.mxu0 0.0
  %395 = vmatprep.mubr.f32.mxu0 0.0
  %396 = vmatmul.mubr.f32.gmra.mrb[0].mxu0 %v260
  %v397 = vpop.f32.mrb[0].mxu0
  %v398 = vadd.f32 0.0, %v397
  %v399 = vpop.f32.mrb[0].mxu0
  %v400 = vadd.f32 0.0, %v399
  %401 = vdwg.mxu0
  %402 = vmatprep.subr.mxu0 %v270
  %403 = vmatpush1.msra.mxu0 %v269
  %404 = vmatprep.subr.mxu0 %v274
  %405 = vmatpush1.msra.mxu0 %v273
  %406 = vmatprep.subr.mxu0 %v278
  %407 = vmatpush1.msra.mxu0 %v277
  %408 = vmatprep.subr.mxu0 %v282
  %409 = vmatpush1.msra.mxu0 %v281
  %410 = vmatprep.subr.mxu0 %v286
  %411 = vmatpush1.msra.mxu0 %v285
  %412 = vmatprep.subr.mxu0 %v290
  %413 = vmatpush1.msra.mxu0 %v289
  %414 = vmatprep.subr.mxu0 %v294
  %415 = vmatpush1.msra.mxu0 %v293
  %416 = vmatprep.subr.mxu0 %v298
  %417 = vmatpush1.msra.mxu0 %v297
  %418 = vmatprep.subr.mxu0 %v302
  %419 = vmatpush1.msra.mxu0 %v301
  %420 = vmatprep.subr.mxu0 %v306
  %421 = vmatpush1.msra.mxu0 %v305
  %422 = vmatprep.subr.mxu0 %v310
  %423 = vmatpush1.msra.mxu0 %v309
  %424 = vmatprep.subr.mxu0 %v314
  %425 = vmatpush1.msra.mxu0 %v313
  %426 = vmatprep.subr.mxu0 %v318
  %427 = vmatpush1.msra.mxu0 %v317
  %428 = vmatprep.subr.mxu0 %v322
  %429 = vmatpush1.msra.mxu0 %v321
  %430 = vmatprep.subr.mxu0 %v326
  %431 = vmatpush1.msra.mxu0 %v325
  %432 = vmatprep.subr.mxu0 %v330
  %433 = vmatpush1.msra.mxu0 %v329
  %434 = vmatprep.subr.mxu0 0.0
  %435 = vmatpush1.msra.mxu0 0.0
  %436 = vmatprep.subr.mxu0 0.0
  %437 = vmatpush1.msra.mxu0 0.0
  %438 = vmatprep.subr.mxu0 0.0
  %439 = vmatpush1.msra.mxu0 0.0
  %440 = vmatprep.subr.mxu0 0.0
  %441 = vmatpush1.msra.mxu0 0.0
  %442 = vmatprep.subr.mxu0 0.0
  %443 = vmatpush1.msra.mxu0 0.0
  %444 = vmatprep.subr.mxu0 0.0
  %445 = vmatpush1.msra.mxu0 0.0
  %446 = vmatprep.subr.mxu0 0.0
  %447 = vmatpush1.msra.mxu0 0.0
  %448 = vmatprep.subr.mxu0 0.0
  %449 = vmatpush1.msra.mxu0 0.0
  %450 = vmatprep.subr.mxu0 0.0
  %451 = vmatpush1.msra.mxu0 0.0
  %452 = vmatprep.subr.mxu0 0.0
  %453 = vmatpush1.msra.mxu0 0.0
  %454 = vmatprep.subr.mxu0 0.0
  %455 = vmatpush1.msra.mxu0 0.0
  %456 = vmatprep.subr.mxu0 0.0
  %457 = vmatpush1.msra.mxu0 0.0
  %458 = vmatprep.subr.mxu0 0.0
  %459 = vmatpush1.msra.mxu0 0.0
  %460 = vmatprep.subr.mxu0 0.0
  %461 = vmatpush1.msra.mxu0 0.0
  %462 = vmatprep.subr.mxu0 0.0
  %463 = vmatpush1.msra.mxu0 0.0
  %464 = vmatprep.subr.mxu0 0.0
  %465 = vmatpush1.msra.mxu0 0.0
  %466 = vmatprep.mubr.f32.mxu0 0.0
  %467 = vmatmul.mubr.f32.gmra.mrb[0].mxu0 %v260
  %v468 = vpop.f32.mrb[0].mxu0
  %v469 = vadd.f32 0.0, %v468
  %v470 = vpop.f32.mrb[0].mxu0
  %v471 = vadd.f32 0.0, %v470
  %472 = vdwg.mxu0
  %v473 = vadd.f32 %v263, %v398
  %v474 = vadd.f32 %v264, %v400
  %v475 = vadd.f32 %v265, %v469
  %v476 = vadd.f32 %v266, %v471
  %v477 = vmul.f32 %v473, 0.5
  %v478 = vmul.f32 %v474, 0.5
  %v479 = vmul.f32 %v475, 0.5
  %v480 = vtanh.pop %v477
  %v481 = vtanh.pop %v478
  %v482 = vtanh.pop %v479
  %v483 = vmul.f32 %v480, 0.5
  %v484 = vmul.f32 %v481, 0.5
  %v485 = vmul.f32 %v482, 0.5
  %v486 = vadd.f32 %v483, 0.5
  %v487 = vadd.f32 %v484, 0.5
  %v488 = vadd.f32 %v485, 0.5
  %v489 = vtanh.pop %v476
  %v490 = vmul.f32 %v487, %v258
  %v491 = vmul.f32 %v486, %v489
  %v492 = vadd.f32 %v490, %v491
  %v493 = vtanh.pop %v492
  %v494 = vmul.f32 %v488, %v493
  %s495 = scalar_lea.vmem %s4, 8
  %496 = vst [vmem:[%s495] sm:$0xff] %v494
  %s497 = scalar_lea.vmem %s0, 64
  %v498 = vld [vmem:[%s497] sm:$0xff]
  %v499 = vld [vmem:[%s497 + $0x8] sm:$0xff]
  %v500 = vld [vmem:[%s497 + $0x10] sm:$0xff]
  %v501 = vld [vmem:[%s497 + $0x18] sm:$0xff]
  %v502 = vld [vmem:[%s1] sm:$0xff]
  %v503 = vld [vmem:[%s1 + $0x8] sm:$0xff]
  %v504 = vld [vmem:[%s1 + $0x10] sm:$0xff]
  %v505 = vld [vmem:[%s1 + $0x18] sm:$0xff]
  %v506 = vld [vmem:[%s1 + $0x20] sm:$0xff]
  %v507 = vld [vmem:[%s1 + $0x28] sm:$0xff]
  %v508 = vld [vmem:[%s1 + $0x30] sm:$0xff]
  %v509 = vld [vmem:[%s1 + $0x38] sm:$0xff]
  %v510 = vld [vmem:[%s1 + $0x40] sm:$0xff]
  %v511 = vld [vmem:[%s1 + $0x48] sm:$0xff]
  %v512 = vld [vmem:[%s1 + $0x50] sm:$0xff]
  %v513 = vld [vmem:[%s1 + $0x58] sm:$0xff]
  %v514 = vld [vmem:[%s1 + $0x60] sm:$0xff]
  %v515 = vld [vmem:[%s1 + $0x68] sm:$0xff]
  %v516 = vld [vmem:[%s1 + $0x70] sm:$0xff]
  %v517 = vld [vmem:[%s1 + $0x78] sm:$0xff]
  %v518 = vld [vmem:[%s1 + $0x80] sm:$0xff]
  %v519 = vld [vmem:[%s1 + $0x88] sm:$0xff]
  %v520 = vld [vmem:[%s1 + $0x90] sm:$0xff]
  %v521 = vld [vmem:[%s1 + $0x98] sm:$0xff]
  %v522 = vld [vmem:[%s1 + $0xa0] sm:$0xff]
  %v523 = vld [vmem:[%s1 + $0xa8] sm:$0xff]
  %v524 = vld [vmem:[%s1 + $0xb0] sm:$0xff]
  %v525 = vld [vmem:[%s1 + $0xb8] sm:$0xff]
  %v526 = vld [vmem:[%s1 + $0xc0] sm:$0xff]
  %v527 = vld [vmem:[%s1 + $0xc8] sm:$0xff]
  %v528 = vld [vmem:[%s1 + $0xd0] sm:$0xff]
  %v529 = vld [vmem:[%s1 + $0xd8] sm:$0xff]
  %v530 = vld [vmem:[%s1 + $0xe0] sm:$0xff]
  %v531 = vld [vmem:[%s1 + $0xe8] sm:$0xff]
  %v532 = vld [vmem:[%s1 + $0xf0] sm:$0xff]
  %v533 = vld [vmem:[%s1 + $0xf8] sm:$0xff]
  %v534 = vld [vmem:[%s1 + $0x100] sm:$0xff]
  %v535 = vld [vmem:[%s1 + $0x108] sm:$0xff]
  %v536 = vld [vmem:[%s1 + $0x110] sm:$0xff]
  %v537 = vld [vmem:[%s1 + $0x118] sm:$0xff]
  %v538 = vld [vmem:[%s1 + $0x120] sm:$0xff]
  %v539 = vld [vmem:[%s1 + $0x128] sm:$0xff]
  %v540 = vld [vmem:[%s1 + $0x130] sm:$0xff]
  %v541 = vld [vmem:[%s1 + $0x138] sm:$0xff]
  %v542 = vld [vmem:[%s1 + $0x140] sm:$0xff]
  %v543 = vld [vmem:[%s1 + $0x148] sm:$0xff]
  %v544 = vld [vmem:[%s1 + $0x150] sm:$0xff]
  %v545 = vld [vmem:[%s1 + $0x158] sm:$0xff]
  %v546 = vld [vmem:[%s1 + $0x160] sm:$0xff]
  %v547 = vld [vmem:[%s1 + $0x168] sm:$0xff]
  %v548 = vld [vmem:[%s1 + $0x170] sm:$0xff]
  %v549 = vld [vmem:[%s1 + $0x178] sm:$0xff]
  %v550 = vld [vmem:[%s1 + $0x180] sm:$0xff]
  %v551 = vld [vmem:[%s1 + $0x188] sm:$0xff]
  %v552 = vld [vmem:[%s1 + $0x190] sm:$0xff]
  %v553 = vld [vmem:[%s1 + $0x198] sm:$0xff]
  %v554 = vld [vmem:[%s1 + $0x1a0] sm:$0xff]
  %v555 = vld [vmem:[%s1 + $0x1a8] sm:$0xff]
  %v556 = vld [vmem:[%s1 + $0x1b0] sm:$0xff]
  %v557 = vld [vmem:[%s1 + $0x1b8] sm:$0xff]
  %v558 = vld [vmem:[%s1 + $0x1c0] sm:$0xff]
  %v559 = vld [vmem:[%s1 + $0x1c8] sm:$0xff]
  %v560 = vld [vmem:[%s1 + $0x1d0] sm:$0xff]
  %v561 = vld [vmem:[%s1 + $0x1d8] sm:$0xff]
  %v562 = vld [vmem:[%s1 + $0x1e0] sm:$0xff]
  %v563 = vld [vmem:[%s1 + $0x1e8] sm:$0xff]
  %v564 = vld [vmem:[%s1 + $0x1f0] sm:$0xff]
  %v565 = vld [vmem:[%s1 + $0x1f8] sm:$0xff]
  %566 = vmatprep.subr.mxu0 %v503
  %567 = vmatpush1.msra.mxu0 %v502
  %568 = vmatprep.subr.mxu0 %v507
  %569 = vmatpush1.msra.mxu0 %v506
  %570 = vmatprep.subr.mxu0 %v511
  %571 = vmatpush1.msra.mxu0 %v510
  %572 = vmatprep.subr.mxu0 %v515
  %573 = vmatpush1.msra.mxu0 %v514
  %574 = vmatprep.subr.mxu0 %v519
  %575 = vmatpush1.msra.mxu0 %v518
  %576 = vmatprep.subr.mxu0 %v523
  %577 = vmatpush1.msra.mxu0 %v522
  %578 = vmatprep.subr.mxu0 %v527
  %579 = vmatpush1.msra.mxu0 %v526
  %580 = vmatprep.subr.mxu0 %v531
  %581 = vmatpush1.msra.mxu0 %v530
  %582 = vmatprep.subr.mxu0 %v535
  %583 = vmatpush1.msra.mxu0 %v534
  %584 = vmatprep.subr.mxu0 %v539
  %585 = vmatpush1.msra.mxu0 %v538
  %586 = vmatprep.subr.mxu0 %v543
  %587 = vmatpush1.msra.mxu0 %v542
  %588 = vmatprep.subr.mxu0 %v547
  %589 = vmatpush1.msra.mxu0 %v546
  %590 = vmatprep.subr.mxu0 %v551
  %591 = vmatpush1.msra.mxu0 %v550
  %592 = vmatprep.subr.mxu0 %v555
  %593 = vmatpush1.msra.mxu0 %v554
  %594 = vmatprep.subr.mxu0 %v559
  %595 = vmatpush1.msra.mxu0 %v558
  %596 = vmatprep.subr.mxu0 %v563
  %597 = vmatpush1.msra.mxu0 %v562
  %598 = vmatprep.subr.mxu0 0.0
  %599 = vmatpush1.msra.mxu0 0.0
  %600 = vmatprep.subr.mxu0 0.0
  %601 = vmatpush1.msra.mxu0 0.0
  %602 = vmatprep.subr.mxu0 0.0
  %603 = vmatpush1.msra.mxu0 0.0
  %604 = vmatprep.subr.mxu0 0.0
  %605 = vmatpush1.msra.mxu0 0.0
  %606 = vmatprep.subr.mxu0 0.0
  %607 = vmatpush1.msra.mxu0 0.0
  %608 = vmatprep.subr.mxu0 0.0
  %609 = vmatpush1.msra.mxu0 0.0
  %610 = vmatprep.subr.mxu0 0.0
  %611 = vmatpush1.msra.mxu0 0.0
  %612 = vmatprep.subr.mxu0 0.0
  %613 = vmatpush1.msra.mxu0 0.0
  %614 = vmatprep.subr.mxu0 0.0
  %615 = vmatpush1.msra.mxu0 0.0
  %616 = vmatprep.subr.mxu0 0.0
  %617 = vmatpush1.msra.mxu0 0.0
  %618 = vmatprep.subr.mxu0 0.0
  %619 = vmatpush1.msra.mxu0 0.0
  %620 = vmatprep.subr.mxu0 0.0
  %621 = vmatpush1.msra.mxu0 0.0
  %622 = vmatprep.subr.mxu0 0.0
  %623 = vmatpush1.msra.mxu0 0.0
  %624 = vmatprep.subr.mxu0 0.0
  %625 = vmatpush1.msra.mxu0 0.0
  %626 = vmatprep.subr.mxu0 0.0
  %627 = vmatpush1.msra.mxu0 0.0
  %628 = vmatprep.subr.mxu0 0.0
  %629 = vmatpush1.msra.mxu0 0.0
  %630 = vmatprep.mubr.f32.mxu0 0.0
  %631 = vmatmul.mubr.f32.gmra.mrb[0].mxu0 %v494
  %v632 = vpop.f32.mrb[0].mxu0
  %v633 = vadd.f32 0.0, %v632
  %v634 = vpop.f32.mrb[0].mxu0
  %v635 = vadd.f32 0.0, %v634
  %636 = vdwg.mxu0
  %637 = vmatprep.subr.mxu0 %v505
  %638 = vmatpush1.msra.mxu0 %v504
  %639 = vmatprep.subr.mxu0 %v509
  %640 = vmatpush1.msra.mxu0 %v508
  %641 = vmatprep.subr.mxu0 %v513
  %642 = vmatpush1.msra.mxu0 %v512
  %643 = vmatprep.subr.mxu0 %v517
  %644 = vmatpush1.msra.mxu0 %v516
  %645 = vmatprep.subr.mxu0 %v521
  %646 = vmatpush1.msra.mxu0 %v520
  %647 = vmatprep.subr.mxu0 %v525
  %648 = vmatpush1.msra.mxu0 %v524
  %649 = vmatprep.subr.mxu0 %v529
  %650 = vmatpush1.msra.mxu0 %v528
  %651 = vmatprep.subr.mxu0 %v533
  %652 = vmatpush1.msra.mxu0 %v532
  %653 = vmatprep.subr.mxu0 %v537
  %654 = vmatpush1.msra.mxu0 %v536
  %655 = vmatprep.subr.mxu0 %v541
  %656 = vmatpush1.msra.mxu0 %v540
  %657 = vmatprep.subr.mxu0 %v545
  %658 = vmatpush1.msra.mxu0 %v544
  %659 = vmatprep.subr.mxu0 %v549
  %660 = vmatpush1.msra.mxu0 %v548
  %661 = vmatprep.subr.mxu0 %v553
  %662 = vmatpush1.msra.mxu0 %v552
  %663 = vmatprep.subr.mxu0 %v557
  %664 = vmatpush1.msra.mxu0 %v556
  %665 = vmatprep.subr.mxu0 %v561
  %666 = vmatpush1.msra.mxu0 %v560
  %667 = vmatprep.subr.mxu0 %v565
  %668 = vmatpush1.msra.mxu0 %v564
  %669 = vmatprep.subr.mxu0 0.0
  %670 = vmatpush1.msra.mxu0 0.0
  %671 = vmatprep.subr.mxu0 0.0
  %672 = vmatpush1.msra.mxu0 0.0
  %673 = vmatprep.subr.mxu0 0.0
  %674 = vmatpush1.msra.mxu0 0.0
  %675 = vmatprep.subr.mxu0 0.0
  %676 = vmatpush1.msra.mxu0 0.0
  %677 = vmatprep.subr.mxu0 0.0
  %678 = vmatpush1.msra.mxu0 0.0
  %679 = vmatprep.subr.mxu0 0.0
  %680 = vmatpush1.msra.mxu0 0.0
  %681 = vmatprep.subr.mxu0 0.0
  %682 = vmatpush1.msra.mxu0 0.0
  %683 = vmatprep.subr.mxu0 0.0
  %684 = vmatpush1.msra.mxu0 0.0
  %685 = vmatprep.subr.mxu0 0.0
  %686 = vmatpush1.msra.mxu0 0.0
  %687 = vmatprep.subr.mxu0 0.0
  %688 = vmatpush1.msra.mxu0 0.0
  %689 = vmatprep.subr.mxu0 0.0
  %690 = vmatpush1.msra.mxu0 0.0
  %691 = vmatprep.subr.mxu0 0.0
  %692 = vmatpush1.msra.mxu0 0.0
  %693 = vmatprep.subr.mxu0 0.0
  %694 = vmatpush1.msra.mxu0 0.0
  %695 = vmatprep.subr.mxu0 0.0
  %696 = vmatpush1.msra.mxu0 0.0
  %697 = vmatprep.subr.mxu0 0.0
  %698 = vmatpush1.msra.mxu0 0.0
  %699 = vmatprep.subr.mxu0 0.0
  %700 = vmatpush1.msra.mxu0 0.0
  %701 = vmatprep.mubr.f32.mxu0 0.0
  %702 = vmatmul.mubr.f32.gmra.mrb[0].mxu0 %v494
  %v703 = vpop.f32.mrb[0].mxu0
  %v704 = vadd.f32 0.0, %v703
  %v705 = vpop.f32.mrb[0].mxu0
  %v706 = vadd.f32 0.0, %v705
  %707 = vdwg.mxu0
  %v708 = vadd.f32 %v498, %v633
  %v709 = vadd.f32 %v499, %v635
  %v710 = vadd.f32 %v500, %v704
  %v711 = vadd.f32 %v501, %v706
  %v712 = vmul.f32 %v708, 0.5
  %v713 = vmul.f32 %v709, 0.5
  %v714 = vmul.f32 %v710, 0.5
  %v715 = vtanh.pop %v712
  %v716 = vtanh.pop %v713
  %v717 = vtanh.pop %v714
  %v718 = vmul.f32 %v715, 0.5
  %v719 = vmul.f32 %v716, 0.5
  %v720 = vmul.f32 %v717, 0.5
  %v721 = vadd.f32 %v718, 0.5
  %v722 = vadd.f32 %v719, 0.5
  %v723 = vadd.f32 %v720, 0.5
  %v724 = vtanh.pop %v711
  %v725 = vmul.f32 %v722, %v492
  %v726 = vmul.f32 %v721, %v724
  %v727 = vadd.f32 %v725, %v726
  %v728 = vtanh.pop %v727
  %v729 = vmul.f32 %v723, %v728
  %s730 = scalar_lea.vmem %s4, 16
  %731 = vst [vmem:[%s730] sm:$0xff] %v729
  %s732 = scalar_lea.vmem %s0, 96
  %v733 = vld [vmem:[%s732] sm:$0xff]
  %v734 = vld [vmem:[%s732 + $0x8] sm:$0xff]
  %v735 = vld [vmem:[%s732 + $0x10] sm:$0xff]
  %v736 = vld [vmem:[%s732 + $0x18] sm:$0xff]
  %v737 = vld [vmem:[%s1] sm:$0xff]
  %v738 = vld [vmem:[%s1 + $0x8] sm:$0xff]
  %v739 = vld [vmem:[%s1 + $0x10] sm:$0xff]
  %v740 = vld [vmem:[%s1 + $0x18] sm:$0xff]
  %v741 = vld [vmem:[%s1 + $0x20] sm:$0xff]
  %v742 = vld [vmem:[%s1 + $0x28] sm:$0xff]
  %v743 = vld [vmem:[%s1 + $0x30] sm:$0xff]
  %v744 = vld [vmem:[%s1 + $0x38] sm:$0xff]
  %v745 = vld [vmem:[%s1 + $0x40] sm:$0xff]
  %v746 = vld [vmem:[%s1 + $0x48] sm:$0xff]
  %v747 = vld [vmem:[%s1 + $0x50] sm:$0xff]
  %v748 = vld [vmem:[%s1 + $0x58] sm:$0xff]
  %v749 = vld [vmem:[%s1 + $0x60] sm:$0xff]
  %v750 = vld [vmem:[%s1 + $0x68] sm:$0xff]
  %v751 = vld [vmem:[%s1 + $0x70] sm:$0xff]
  %v752 = vld [vmem:[%s1 + $0x78] sm:$0xff]
  %v753 = vld [vmem:[%s1 + $0x80] sm:$0xff]
  %v754 = vld [vmem:[%s1 + $0x88] sm:$0xff]
  %v755 = vld [vmem:[%s1 + $0x90] sm:$0xff]
  %v756 = vld [vmem:[%s1 + $0x98] sm:$0xff]
  %v757 = vld [vmem:[%s1 + $0xa0] sm:$0xff]
  %v758 = vld [vmem:[%s1 + $0xa8] sm:$0xff]
  %v759 = vld [vmem:[%s1 + $0xb0] sm:$0xff]
  %v760 = vld [vmem:[%s1 + $0xb8] sm:$0xff]
  %v761 = vld [vmem:[%s1 + $0xc0] sm:$0xff]
  %v762 = vld [vmem:[%s1 + $0xc8] sm:$0xff]
  %v763 = vld [vmem:[%s1 + $0xd0] sm:$0xff]
  %v764 = vld [vmem:[%s1 + $0xd8] sm:$0xff]
  %v765 = vld [vmem:[%s1 + $0xe0] sm:$0xff]
  %v766 = vld [vmem:[%s1 + $0xe8] sm:$0xff]
  %v767 = vld [vmem:[%s1 + $0xf0] sm:$0xff]
  %v768 = vld [vmem:[%s1 + $0xf8] sm:$0xff]
  %v769 = vld [vmem:[%s1 + $0x100] sm:$0xff]
  %v770 = vld [vmem:[%s1 + $0x108] sm:$0xff]
  %v771 = vld [vmem:[%s1 + $0x110] sm:$0xff]
  %v772 = vld [vmem:[%s1 + $0x118] sm:$0xff]
  %v773 = vld [vmem:[%s1 + $0x120] sm:$0xff]
  %v774 = vld [vmem:[%s1 + $0x128] sm:$0xff]
  %v775 = vld [vmem:[%s1 + $0x130] sm:$0xff]
  %v776 = vld [vmem:[%s1 + $0x138] sm:$0xff]
  %v777 = vld [vmem:[%s1 + $0x140] sm:$0xff]
  %v778 = vld [vmem:[%s1 + $0x148] sm:$0xff]
  %v779 = vld [vmem:[%s1 + $0x150] sm:$0xff]
  %v780 = vld [vmem:[%s1 + $0x158] sm:$0xff]
  %v781 = vld [vmem:[%s1 + $0x160] sm:$0xff]
  %v782 = vld [vmem:[%s1 + $0x168] sm:$0xff]
  %v783 = vld [vmem:[%s1 + $0x170] sm:$0xff]
  %v784 = vld [vmem:[%s1 + $0x178] sm:$0xff]
  %v785 = vld [vmem:[%s1 + $0x180] sm:$0xff]
  %v786 = vld [vmem:[%s1 + $0x188] sm:$0xff]
  %v787 = vld [vmem:[%s1 + $0x190] sm:$0xff]
  %v788 = vld [vmem:[%s1 + $0x198] sm:$0xff]
  %v789 = vld [vmem:[%s1 + $0x1a0] sm:$0xff]
  %v790 = vld [vmem:[%s1 + $0x1a8] sm:$0xff]
  %v791 = vld [vmem:[%s1 + $0x1b0] sm:$0xff]
  %v792 = vld [vmem:[%s1 + $0x1b8] sm:$0xff]
  %v793 = vld [vmem:[%s1 + $0x1c0] sm:$0xff]
  %v794 = vld [vmem:[%s1 + $0x1c8] sm:$0xff]
  %v795 = vld [vmem:[%s1 + $0x1d0] sm:$0xff]
  %v796 = vld [vmem:[%s1 + $0x1d8] sm:$0xff]
  %v797 = vld [vmem:[%s1 + $0x1e0] sm:$0xff]
  %v798 = vld [vmem:[%s1 + $0x1e8] sm:$0xff]
  %v799 = vld [vmem:[%s1 + $0x1f0] sm:$0xff]
  %v800 = vld [vmem:[%s1 + $0x1f8] sm:$0xff]
  %801 = vmatprep.subr.mxu0 %v738
  %802 = vmatpush1.msra.mxu0 %v737
  %803 = vmatprep.subr.mxu0 %v742
  %804 = vmatpush1.msra.mxu0 %v741
  %805 = vmatprep.subr.mxu0 %v746
  %806 = vmatpush1.msra.mxu0 %v745
  %807 = vmatprep.subr.mxu0 %v750
  %808 = vmatpush1.msra.mxu0 %v749
  %809 = vmatprep.subr.mxu0 %v754
  %810 = vmatpush1.msra.mxu0 %v753
  %811 = vmatprep.subr.mxu0 %v758
  %812 = vmatpush1.msra.mxu0 %v757
  %813 = vmatprep.subr.mxu0 %v762
  %814 = vmatpush1.msra.mxu0 %v761
  %815 = vmatprep.subr.mxu0 %v766
  %816 = vmatpush1.msra.mxu0 %v765
  %817 = vmatprep.subr.mxu0 %v770
  %818 = vmatpush1.msra.mxu0 %v769
  %819 = vmatprep.subr.mxu0 %v774
  %820 = vmatpush1.msra.mxu0 %v773
  %821 = vmatprep.subr.mxu0 %v778
  %822 = vmatpush1.msra.mxu0 %v777
  %823 = vmatprep.subr.mxu0 %v782
  %824 = vmatpush1.msra.mxu0 %v781
  %825 = vmatprep.subr.mxu0 %v786
  %826 = vmatpush1.msra.mxu0 %v785
  %827 = vmatprep.subr.mxu0 %v790
  %828 = vmatpush1.msra.mxu0 %v789
  %829 = vmatprep.subr.mxu0 %v794
  %830 = vmatpush1.msra.mxu0 %v793
  %831 = vmatprep.subr.mxu0 %v798
  %832 = vmatpush1.msra.mxu0 %v797
  %833 = vmatprep.subr.mxu0 0.0
  %834 = vmatpush1.msra.mxu0 0.0
  %835 = vmatprep.subr.mxu0 0.0
  %836 = vmatpush1.msra.mxu0 0.0
  %837 = vmatprep.subr.mxu0 0.0
  %838 = vmatpush1.msra.mxu0 0.0
  %839 = vmatprep.subr.mxu0 0.0
  %840 = vmatpush1.msra.mxu0 0.0
  %841 = vmatprep.subr.mxu0 0.0
  %842 = vmatpush1.msra.mxu0 0.0
  %843 = vmatprep.subr.mxu0 0.0
  %844 = vmatpush1.msra.mxu0 0.0
  %845 = vmatprep.subr.mxu0 0.0
  %846 = vmatpush1.msra.mxu0 0.0
  %847 = vmatprep.subr.mxu0 0.0
  %848 = vmatpush1.msra.mxu0 0.0
  %849 = vmatprep.subr.mxu0 0.0
  %850 = vmatpush1.msra.mxu0 0.0
  %851 = vmatprep.subr.mxu0 0.0
  %852 = vmatpush1.msra.mxu0 0.0
  %853 = vmatprep.subr.mxu0 0.0
  %854 = vmatpush1.msra.mxu0 0.0
  %855 = vmatprep.subr.mxu0 0.0
  %856 = vmatpush1.msra.mxu0 0.0
  %857 = vmatprep.subr.mxu0 0.0
  %858 = vmatpush1.msra.mxu0 0.0
  %859 = vmatprep.subr.mxu0 0.0
  %860 = vmatpush1.msra.mxu0 0.0
  %861 = vmatprep.subr.mxu0 0.0
  %862 = vmatpush1.msra.mxu0 0.0
  %863 = vmatprep.subr.mxu0 0.0
  %864 = vmatpush1.msra.mxu0 0.0
  %865 = vmatprep.mubr.f32.mxu0 0.0
  %866 = vmatmul.mubr.f32.gmra.mrb[0].mxu0 %v729
  %v867 = vpop.f32.mrb[0].mxu0
  %v868 = vadd.f32 0.0, %v867
  %v869 = vpop.f32.mrb[0].mxu0
  %v870 = vadd.f32 0.0, %v869
  %871 = vdwg.mxu0
  %872 = vmatprep.subr.mxu0 %v740
  %873 = vmatpush1.msra.mxu0 %v739
  %874 = vmatprep.subr.mxu0 %v744
  %875 = vmatpush1.msra.mxu0 %v743
  %876 = vmatprep.subr.mxu0 %v748
  %877 = vmatpush1.msra.mxu0 %v747
  %878 = vmatprep.subr.mxu0 %v752
  %879 = vmatpush1.msra.mxu0 %v751
  %880 = vmatprep.subr.mxu0 %v756
  %881 = vmatpush1.msra.mxu0 %v755
  %882 = vmatprep.subr.mxu0 %v760
  %883 = vmatpush1.msra.mxu0 %v759
  %884 = vmatprep.subr.mxu0 %v764
  %885 = vmatpush1.msra.mxu0 %v763
  %886 = vmatprep.subr.mxu0 %v768
  %887 = vmatpush1.msra.mxu0 %v767
  %888 = vmatprep.subr.mxu0 %v772
  %889 = vmatpush1.msra.mxu0 %v771
  %890 = vmatprep.subr.mxu0 %v776
  %891 = vmatpush1.msra.mxu0 %v775
  %892 = vmatprep.subr.mxu0 %v780
  %893 = vmatpush1.msra.mxu0 %v779
  %894 = vmatprep.subr.mxu0 %v784
  %895 = vmatpush1.msra.mxu0 %v783
  %896 = vmatprep.subr.mxu0 %v788
  %897 = vmatpush1.msra.mxu0 %v787
  %898 = vmatprep.subr.mxu0 %v792
  %899 = vmatpush1.msra.mxu0 %v791
  %900 = vmatprep.subr.mxu0 %v796
  %901 = vmatpush1.msra.mxu0 %v795
  %902 = vmatprep.subr.mxu0 %v800
  %903 = vmatpush1.msra.mxu0 %v799
  %904 = vmatprep.subr.mxu0 0.0
  %905 = vmatpush1.msra.mxu0 0.0
  %906 = vmatprep.subr.mxu0 0.0
  %907 = vmatpush1.msra.mxu0 0.0
  %908 = vmatprep.subr.mxu0 0.0
  %909 = vmatpush1.msra.mxu0 0.0
  %910 = vmatprep.subr.mxu0 0.0
  %911 = vmatpush1.msra.mxu0 0.0
  %912 = vmatprep.subr.mxu0 0.0
  %913 = vmatpush1.msra.mxu0 0.0
  %914 = vmatprep.subr.mxu0 0.0
  %915 = vmatpush1.msra.mxu0 0.0
  %916 = vmatprep.subr.mxu0 0.0
  %917 = vmatpush1.msra.mxu0 0.0
  %918 = vmatprep.subr.mxu0 0.0
  %919 = vmatpush1.msra.mxu0 0.0
  %920 = vmatprep.subr.mxu0 0.0
  %921 = vmatpush1.msra.mxu0 0.0
  %922 = vmatprep.subr.mxu0 0.0
  %923 = vmatpush1.msra.mxu0 0.0
  %924 = vmatprep.subr.mxu0 0.0
  %925 = vmatpush1.msra.mxu0 0.0
  %926 = vmatprep.subr.mxu0 0.0
  %927 = vmatpush1.msra.mxu0 0.0
  %928 = vmatprep.subr.mxu0 0.0
  %929 = vmatpush1.msra.mxu0 0.0
  %930 = vmatprep.subr.mxu0 0.0
  %931 = vmatpush1.msra.mxu0 0.0
  %932 = vmatprep.subr.mxu0 0.0
  %933 = vmatpush1.msra.mxu0 0.0
  %934 = vmatprep.subr.mxu0 0.0
  %935 = vmatpush1.msra.mxu0 0.0
  %936 = vmatprep.mubr.f32.mxu0 0.0
  %937 = vmatmul.mubr.f32.gmra.mrb[0].mxu0 %v729
  %v938 = vpop.f32.mrb[0].mxu0
  %v939 = vadd.f32 0.0, %v938
  %v940 = vpop.f32.mrb[0].mxu0
  %v941 = vadd.f32 0.0, %v940
  %942 = vdwg.mxu0
  %v943 = vadd.f32 %v733, %v868
  %v944 = vadd.f32 %v734, %v870
  %v945 = vadd.f32 %v735, %v939
  %v946 = vadd.f32 %v736, %v941
  %v947 = vmul.f32 %v943, 0.5
  %v948 = vmul.f32 %v944, 0.5
  %v949 = vmul.f32 %v945, 0.5
  %v950 = vtanh.pop %v947
  %v951 = vtanh.pop %v948
  %v952 = vtanh.pop %v949
  %v953 = vmul.f32 %v950, 0.5
  %v954 = vmul.f32 %v951, 0.5
  %v955 = vmul.f32 %v952, 0.5
  %v956 = vadd.f32 %v953, 0.5
  %v957 = vadd.f32 %v954, 0.5
  %v958 = vadd.f32 %v955, 0.5
  %v959 = vtanh.pop %v946
  %v960 = vmul.f32 %v957, %v727
  %v961 = vmul.f32 %v956, %v959
  %v962 = vadd.f32 %v960, %v961
  %v963 = vtanh.pop %v962
  %v964 = vmul.f32 %v958, %v963
  %s965 = scalar_lea.vmem %s4, 24
  %966 = vst [vmem:[%s965] sm:$0xff] %v964
  %s967 = scalar_lea.vmem %s0, 128
  %v968 = vld [vmem:[%s967] sm:$0xff]
  %v969 = vld [vmem:[%s967 + $0x8] sm:$0xff]
  %v970 = vld [vmem:[%s967 + $0x10] sm:$0xff]
  %v971 = vld [vmem:[%s967 + $0x18] sm:$0xff]
  %v972 = vld [vmem:[%s1] sm:$0xff]
  %v973 = vld [vmem:[%s1 + $0x8] sm:$0xff]
  %v974 = vld [vmem:[%s1 + $0x10] sm:$0xff]
  %v975 = vld [vmem:[%s1 + $0x18] sm:$0xff]
  %v976 = vld [vmem:[%s1 + $0x20] sm:$0xff]
  %v977 = vld [vmem:[%s1 + $0x28] sm:$0xff]
  %v978 = vld [vmem:[%s1 + $0x30] sm:$0xff]
  %v979 = vld [vmem:[%s1 + $0x38] sm:$0xff]
  %v980 = vld [vmem:[%s1 + $0x40] sm:$0xff]
  %v981 = vld [vmem:[%s1 + $0x48] sm:$0xff]
  %v982 = vld [vmem:[%s1 + $0x50] sm:$0xff]
  %v983 = vld [vmem:[%s1 + $0x58] sm:$0xff]
  %v984 = vld [vmem:[%s1 + $0x60] sm:$0xff]
  %v985 = vld [vmem:[%s1 + $0x68] sm:$0xff]
  %v986 = vld [vmem:[%s1 + $0x70] sm:$0xff]
  %v987 = vld [vmem:[%s1 + $0x78] sm:$0xff]
  %v988 = vld [vmem:[%s1 + $0x80] sm:$0xff]
  %v989 = vld [vmem:[%s1 + $0x88] sm:$0xff]
  %v990 = vld [vmem:[%s1 + $0x90] sm:$0xff]
  %v991 = vld [vmem:[%s1 + $0x98] sm:$0xff]
  %v992 = vld [vmem:[%s1 + $0xa0] sm:$0xff]
  %v993 = vld [vmem:[%s1 + $0xa8] sm:$0xff]
  %v994 = vld [vmem:[%s1 + $0xb0] sm:$0xff]
  %v995 = vld [vmem:[%s1 + $0xb8] sm:$0xff]
  %v996 = vld [vmem:[%s1 + $0xc0] sm:$0xff]
  %v997 = vld [vmem:[%s1 + $0xc8] sm:$0xff]
  %v998 = vld [vmem:[%s1 + $0xd0] sm:$0xff]
  %v999 = vld [vmem:[%s1 + $0xd8] sm:$0xff]
  %v1000 = vld [vmem:[%s1 + $0xe0] sm:$0xff]
  %v1001 = vld [vmem:[%s1 + $0xe8] sm:$0xff]
  %v1002 = vld [vmem:[%s1 + $0xf0] sm:$0xff]
  %v1003 = vld [vmem:[%s1 + $0xf8] sm:$0xff]
  %v1004 = vld [vmem:[%s1 + $0x100] sm:$0xff]
  %v1005 = vld [vmem:[%s1 + $0x108] sm:$0xff]
  %v1006 = vld [vmem:[%s1 + $0x110] sm:$0xff]
  %v1007 = vld [vmem:[%s1 + $0x118] sm:$0xff]
  %v1008 = vld [vmem:[%s1 + $0x120] sm:$0xff]
  %v1009 = vld [vmem:[%s1 + $0x128] sm:$0xff]
  %v1010 = vld [vmem:[%s1 + $0x130] sm:$0xff]
  %v1011 = vld [vmem:[%s1 + $0x138] sm:$0xff]
  %v1012 = vld [vmem:[%s1 + $0x140] sm:$0xff]
  %v1013 = vld [vmem:[%s1 + $0x148] sm:$0xff]
  %v1014 = vld [vmem:[%s1 + $0x150] sm:$0xff]
  %v1015 = vld [vmem:[%s1 + $0x158] sm:$0xff]
  %v1016 = vld [vmem:[%s1 + $0x160] sm:$0xff]
  %v1017 = vld [vmem:[%s1 + $0x168] sm:$0xff]
  %v1018 = vld [vmem:[%s1 + $0x170] sm:$0xff]
  %v1019 = vld [vmem:[%s1 + $0x178] sm:$0xff]
  %v1020 = vld [vmem:[%s1 + $0x180] sm:$0xff]
  %v1021 = vld [vmem:[%s1 + $0x188] sm:$0xff]
  %v1022 = vld [vmem:[%s1 + $0x190] sm:$0xff]
  %v1023 = vld [vmem:[%s1 + $0x198] sm:$0xff]
  %v1024 = vld [vmem:[%s1 + $0x1a0] sm:$0xff]
  %v1025 = vld [vmem:[%s1 + $0x1a8] sm:$0xff]
  %v1026 = vld [vmem:[%s1 + $0x1b0] sm:$0xff]
  %v1027 = vld [vmem:[%s1 + $0x1b8] sm:$0xff]
  %v1028 = vld [vmem:[%s1 + $0x1c0] sm:$0xff]
  %v1029 = vld [vmem:[%s1 + $0x1c8] sm:$0xff]
  %v1030 = vld [vmem:[%s1 + $0x1d0] sm:$0xff]
  %v1031 = vld [vmem:[%s1 + $0x1d8] sm:$0xff]
  %v1032 = vld [vmem:[%s1 + $0x1e0] sm:$0xff]
  %v1033 = vld [vmem:[%s1 + $0x1e8] sm:$0xff]
  %v1034 = vld [vmem:[%s1 + $0x1f0] sm:$0xff]
  %v1035 = vld [vmem:[%s1 + $0x1f8] sm:$0xff]
  %1036 = vmatprep.subr.mxu0 %v973
  %1037 = vmatpush1.msra.mxu0 %v972
  %1038 = vmatprep.subr.mxu0 %v977
  %1039 = vmatpush1.msra.mxu0 %v976
  %1040 = vmatprep.subr.mxu0 %v981
  %1041 = vmatpush1.msra.mxu0 %v980
  %1042 = vmatprep.subr.mxu0 %v985
  %1043 = vmatpush1.msra.mxu0 %v984
  %1044 = vmatprep.subr.mxu0 %v989
  %1045 = vmatpush1.msra.mxu0 %v988
  %1046 = vmatprep.subr.mxu0 %v993
  %1047 = vmatpush1.msra.mxu0 %v992
  %1048 = vmatprep.subr.mxu0 %v997
  %1049 = vmatpush1.msra.mxu0 %v996
  %1050 = vmatprep.subr.mxu0 %v1001
  %1051 = vmatpush1.msra.mxu0 %v1000
  %1052 = vmatprep.subr.mxu0 %v1005
  %1053 = vmatpush1.msra.mxu0 %v1004
  %1054 = vmatprep.subr.mxu0 %v1009
  %1055 = vmatpush1.msra.mxu0 %v1008
  %1056 = vmatprep.subr.mxu0 %v1013
  %1057 = vmatpush1.msra.mxu0 %v1012
  %1058 = vmatprep.subr.mxu0 %v1017
  %1059 = vmatpush1.msra.mxu0 %v1016
  %1060 = vmatprep.subr.mxu0 %v1021
  %1061 = vmatpush1.msra.mxu0 %v1020
  %1062 = vmatprep.subr.mxu0 %v1025
  %1063 = vmatpush1.msra.mxu0 %v1024
  %1064 = vmatprep.subr.mxu0 %v1029
  %1065 = vmatpush1.msra.mxu0 %v1028
  %1066 = vmatprep.subr.mxu0 %v1033
  %1067 = vmatpush1.msra.mxu0 %v1032
  %1068 = vmatprep.subr.mxu0 0.0
  %1069 = vmatpush1.msra.mxu0 0.0
  %1070 = vmatprep.subr.mxu0 0.0
  %1071 = vmatpush1.msra.mxu0 0.0
  %1072 = vmatprep.subr.mxu0 0.0
  %1073 = vmatpush1.msra.mxu0 0.0
  %1074 = vmatprep.subr.mxu0 0.0
  %1075 = vmatpush1.msra.mxu0 0.0
  %1076 = vmatprep.subr.mxu0 0.0
  %1077 = vmatpush1.msra.mxu0 0.0
  %1078 = vmatprep.subr.mxu0 0.0
  %1079 = vmatpush1.msra.mxu0 0.0
  %1080 = vmatprep.subr.mxu0 0.0
  %1081 = vmatpush1.msra.mxu0 0.0
  %1082 = vmatprep.subr.mxu0 0.0
  %1083 = vmatpush1.msra.mxu0 0.0
  %1084 = vmatprep.subr.mxu0 0.0
  %1085 = vmatpush1.msra.mxu0 0.0
  %1086 = vmatprep.subr.mxu0 0.0
  %1087 = vmatpush1.msra.mxu0 0.0
  %1088 = vmatprep.subr.mxu0 0.0
  %1089 = vmatpush1.msra.mxu0 0.0
  %1090 = vmatprep.subr.mxu0 0.0
  %1091 = vmatpush1.msra.mxu0 0.0
  %1092 = vmatprep.subr.mxu0 0.0
  %1093 = vmatpush1.msra.mxu0 0.0
  %1094 = vmatprep.subr.mxu0 0.0
  %1095 = vmatpush1.msra.mxu0 0.0
  %1096 = vmatprep.subr.mxu0 0.0
  %1097 = vmatpush1.msra.mxu0 0.0
  %1098 = vmatprep.subr.mxu0 0.0
  %1099 = vmatpush1.msra.mxu0 0.0
  %1100 = vmatprep.mubr.f32.mxu0 0.0
  %1101 = vmatmul.mubr.f32.gmra.mrb[0].mxu0 %v964
  %v1102 = vpop.f32.mrb[0].mxu0
  %v1103 = vadd.f32 0.0, %v1102
  %v1104 = vpop.f32.mrb[0].mxu0
  %v1105 = vadd.f32 0.0, %v1104
  %1106 = vdwg.mxu0
  %1107 = vmatprep.subr.mxu0 %v975
  %1108 = vmatpush1.msra.mxu0 %v974
  %1109 = vmatprep.subr.mxu0 %v979
  %1110 = vmatpush1.msra.mxu0 %v978
  %1111 = vmatprep.subr.mxu0 %v983
  %1112 = vmatpush1.msra.mxu0 %v982
  %1113 = vmatprep.subr.mxu0 %v987
  %1114 = vmatpush1.msra.mxu0 %v986
  %1115 = vmatprep.subr.mxu0 %v991
  %1116 = vmatpush1.msra.mxu0 %v990
  %1117 = vmatprep.subr.mxu0 %v995
  %1118 = vmatpush1.msra.mxu0 %v994
  %1119 = vmatprep.subr.mxu0 %v999
  %1120 = vmatpush1.msra.mxu0 %v998
  %1121 = vmatprep.subr.mxu0 %v1003
  %1122 = vmatpush1.msra.mxu0 %v1002
  %1123 = vmatprep.subr.mxu0 %v1007
  %1124 = vmatpush1.msra.mxu0 %v1006
  %1125 = vmatprep.subr.mxu0 %v1011
  %1126 = vmatpush1.msra.mxu0 %v1010
  %1127 = vmatprep.subr.mxu0 %v1015
  %1128 = vmatpush1.msra.mxu0 %v1014
  %1129 = vmatprep.subr.mxu0 %v1019
  %1130 = vmatpush1.msra.mxu0 %v1018
  %1131 = vmatprep.subr.mxu0 %v1023
  %1132 = vmatpush1.msra.mxu0 %v1022
  %1133 = vmatprep.subr.mxu0 %v1027
  %1134 = vmatpush1.msra.mxu0 %v1026
  %1135 = vmatprep.subr.mxu0 %v1031
  %1136 = vmatpush1.msra.mxu0 %v1030
  %1137 = vmatprep.subr.mxu0 %v1035
  %1138 = vmatpush1.msra.mxu0 %v1034
  %1139 = vmatprep.subr.mxu0 0.0
  %1140 = vmatpush1.msra.mxu0 0.0
  %1141 = vmatprep.subr.mxu0 0.0
  %1142 = vmatpush1.msra.mxu0 0.0
  %1143 = vmatprep.subr.mxu0 0.0
  %1144 = vmatpush1.msra.mxu0 0.0
  %1145 = vmatprep.subr.mxu0 0.0
  %1146 = vmatpush1.msra.mxu0 0.0
  %1147 = vmatprep.subr.mxu0 0.0
  %1148 = vmatpush1.msra.mxu0 0.0
  %1149 = vmatprep.subr.mxu0 0.0
  %1150 = vmatpush1.msra.mxu0 0.0
  %1151 = vmatprep.subr.mxu0 0.0
  %1152 = vmatpush1.msra.mxu0 0.0
  %1153 = vmatprep.subr.mxu0 0.0
  %1154 = vmatpush1.msra.mxu0 0.0
  %1155 = vmatprep.subr.mxu0 0.0
  %1156 = vmatpush1.msra.mxu0 0.0
  %1157 = vmatprep.subr.mxu0 0.0
  %1158 = vmatpush1.msra.mxu0 0.0
  %1159 = vmatprep.subr.mxu0 0.0
  %1160 = vmatpush1.msra.mxu0 0.0
  %1161 = vmatprep.subr.mxu0 0.0
  %1162 = vmatpush1.msra.mxu0 0.0
  %1163 = vmatprep.subr.mxu0 0.0
  %1164 = vmatpush1.msra.mxu0 0.0
  %1165 = vmatprep.subr.mxu0 0.0
  %1166 = vmatpush1.msra.mxu0 0.0
  %1167 = vmatprep.subr.mxu0 0.0
  %1168 = vmatpush1.msra.mxu0 0.0
  %1169 = vmatprep.subr.mxu0 0.0
  %1170 = vmatpush1.msra.mxu0 0.0
  %1171 = vmatprep.mubr.f32.mxu0 0.0
  %1172 = vmatmul.mubr.f32.gmra.mrb[0].mxu0 %v964
  %v1173 = vpop.f32.mrb[0].mxu0
  %v1174 = vadd.f32 0.0, %v1173
  %v1175 = vpop.f32.mrb[0].mxu0
  %v1176 = vadd.f32 0.0, %v1175
  %1177 = vdwg.mxu0
  %v1178 = vadd.f32 %v968, %v1103
  %v1179 = vadd.f32 %v969, %v1105
  %v1180 = vadd.f32 %v970, %v1174
  %v1181 = vadd.f32 %v971, %v1176
  %v1182 = vmul.f32 %v1178, 0.5
  %v1183 = vmul.f32 %v1179, 0.5
  %v1184 = vmul.f32 %v1180, 0.5
  %v1185 = vtanh.pop %v1182
  %v1186 = vtanh.pop %v1183
  %v1187 = vtanh.pop %v1184
  %v1188 = vmul.f32 %v1185, 0.5
  %v1189 = vmul.f32 %v1186, 0.5
  %v1190 = vmul.f32 %v1187, 0.5
  %v1191 = vadd.f32 %v1188, 0.5
  %v1192 = vadd.f32 %v1189, 0.5
  %v1193 = vadd.f32 %v1190, 0.5
  %v1194 = vtanh.pop %v1181
  %v1195 = vmul.f32 %v1192, %v962
  %v1196 = vmul.f32 %v1191, %v1194
  %v1197 = vadd.f32 %v1195, %v1196
  %v1198 = vtanh.pop %v1197
  %v1199 = vmul.f32 %v1193, %v1198
  %s1200 = scalar_lea.vmem %s4, 32
  %1201 = vst [vmem:[%s1200] sm:$0xff] %v1199
  %s1202 = scalar_lea.vmem %s0, 160
  %v1203 = vld [vmem:[%s1202] sm:$0xff]
  %v1204 = vld [vmem:[%s1202 + $0x8] sm:$0xff]
  %v1205 = vld [vmem:[%s1202 + $0x10] sm:$0xff]
  %v1206 = vld [vmem:[%s1202 + $0x18] sm:$0xff]
  %v1207 = vld [vmem:[%s1] sm:$0xff]
  %v1208 = vld [vmem:[%s1 + $0x8] sm:$0xff]
  %v1209 = vld [vmem:[%s1 + $0x10] sm:$0xff]
  %v1210 = vld [vmem:[%s1 + $0x18] sm:$0xff]
  %v1211 = vld [vmem:[%s1 + $0x20] sm:$0xff]
  %v1212 = vld [vmem:[%s1 + $0x28] sm:$0xff]
  %v1213 = vld [vmem:[%s1 + $0x30] sm:$0xff]
  %v1214 = vld [vmem:[%s1 + $0x38] sm:$0xff]
  %v1215 = vld [vmem:[%s1 + $0x40] sm:$0xff]
  %v1216 = vld [vmem:[%s1 + $0x48] sm:$0xff]
  %v1217 = vld [vmem:[%s1 + $0x50] sm:$0xff]
  %v1218 = vld [vmem:[%s1 + $0x58] sm:$0xff]
  %v1219 = vld [vmem:[%s1 + $0x60] sm:$0xff]
  %v1220 = vld [vmem:[%s1 + $0x68] sm:$0xff]
  %v1221 = vld [vmem:[%s1 + $0x70] sm:$0xff]
  %v1222 = vld [vmem:[%s1 + $0x78] sm:$0xff]
  %v1223 = vld [vmem:[%s1 + $0x80] sm:$0xff]
  %v1224 = vld [vmem:[%s1 + $0x88] sm:$0xff]
  %v1225 = vld [vmem:[%s1 + $0x90] sm:$0xff]
  %v1226 = vld [vmem:[%s1 + $0x98] sm:$0xff]
  %v1227 = vld [vmem:[%s1 + $0xa0] sm:$0xff]
  %v1228 = vld [vmem:[%s1 + $0xa8] sm:$0xff]
  %v1229 = vld [vmem:[%s1 + $0xb0] sm:$0xff]
  %v1230 = vld [vmem:[%s1 + $0xb8] sm:$0xff]
  %v1231 = vld [vmem:[%s1 + $0xc0] sm:$0xff]
  %v1232 = vld [vmem:[%s1 + $0xc8] sm:$0xff]
  %v1233 = vld [vmem:[%s1 + $0xd0] sm:$0xff]
  %v1234 = vld [vmem:[%s1 + $0xd8] sm:$0xff]
  %v1235 = vld [vmem:[%s1 + $0xe0] sm:$0xff]
  %v1236 = vld [vmem:[%s1 + $0xe8] sm:$0xff]
  %v1237 = vld [vmem:[%s1 + $0xf0] sm:$0xff]
  %v1238 = vld [vmem:[%s1 + $0xf8] sm:$0xff]
  %v1239 = vld [vmem:[%s1 + $0x100] sm:$0xff]
  %v1240 = vld [vmem:[%s1 + $0x108] sm:$0xff]
  %v1241 = vld [vmem:[%s1 + $0x110] sm:$0xff]
  %v1242 = vld [vmem:[%s1 + $0x118] sm:$0xff]
  %v1243 = vld [vmem:[%s1 + $0x120] sm:$0xff]
  %v1244 = vld [vmem:[%s1 + $0x128] sm:$0xff]
  %v1245 = vld [vmem:[%s1 + $0x130] sm:$0xff]
  %v1246 = vld [vmem:[%s1 + $0x138] sm:$0xff]
  %v1247 = vld [vmem:[%s1 + $0x140] sm:$0xff]
  %v1248 = vld [vmem:[%s1 + $0x148] sm:$0xff]
  %v1249 = vld [vmem:[%s1 + $0x150] sm:$0xff]
  %v1250 = vld [vmem:[%s1 + $0x158] sm:$0xff]
  %v1251 = vld [vmem:[%s1 + $0x160] sm:$0xff]
  %v1252 = vld [vmem:[%s1 + $0x168] sm:$0xff]
  %v1253 = vld [vmem:[%s1 + $0x170] sm:$0xff]
  %v1254 = vld [vmem:[%s1 + $0x178] sm:$0xff]
  %v1255 = vld [vmem:[%s1 + $0x180] sm:$0xff]
  %v1256 = vld [vmem:[%s1 + $0x188] sm:$0xff]
  %v1257 = vld [vmem:[%s1 + $0x190] sm:$0xff]
  %v1258 = vld [vmem:[%s1 + $0x198] sm:$0xff]
  %v1259 = vld [vmem:[%s1 + $0x1a0] sm:$0xff]
  %v1260 = vld [vmem:[%s1 + $0x1a8] sm:$0xff]
  %v1261 = vld [vmem:[%s1 + $0x1b0] sm:$0xff]
  %v1262 = vld [vmem:[%s1 + $0x1b8] sm:$0xff]
  %v1263 = vld [vmem:[%s1 + $0x1c0] sm:$0xff]
  %v1264 = vld [vmem:[%s1 + $0x1c8] sm:$0xff]
  %v1265 = vld [vmem:[%s1 + $0x1d0] sm:$0xff]
  %v1266 = vld [vmem:[%s1 + $0x1d8] sm:$0xff]
  %v1267 = vld [vmem:[%s1 + $0x1e0] sm:$0xff]
  %v1268 = vld [vmem:[%s1 + $0x1e8] sm:$0xff]
  %v1269 = vld [vmem:[%s1 + $0x1f0] sm:$0xff]
  %v1270 = vld [vmem:[%s1 + $0x1f8] sm:$0xff]
  %1271 = vmatprep.subr.mxu0 %v1208
  %1272 = vmatpush1.msra.mxu0 %v1207
  %1273 = vmatprep.subr.mxu0 %v1212
  %1274 = vmatpush1.msra.mxu0 %v1211
  %1275 = vmatprep.subr.mxu0 %v1216
  %1276 = vmatpush1.msra.mxu0 %v1215
  %1277 = vmatprep.subr.mxu0 %v1220
  %1278 = vmatpush1.msra.mxu0 %v1219
  %1279 = vmatprep.subr.mxu0 %v1224
  %1280 = vmatpush1.msra.mxu0 %v1223
  %1281 = vmatprep.subr.mxu0 %v1228
  %1282 = vmatpush1.msra.mxu0 %v1227
  %1283 = vmatprep.subr.mxu0 %v1232
  %1284 = vmatpush1.msra.mxu0 %v1231
  %1285 = vmatprep.subr.mxu0 %v1236
  %1286 = vmatpush1.msra.mxu0 %v1235
  %1287 = vmatprep.subr.mxu0 %v1240
  %1288 = vmatpush1.msra.mxu0 %v1239
  %1289 = vmatprep.subr.mxu0 %v1244
  %1290 = vmatpush1.msra.mxu0 %v1243
  %1291 = vmatprep.subr.mxu0 %v1248
  %1292 = vmatpush1.msra.mxu0 %v1247
  %1293 = vmatprep.subr.mxu0 %v1252
  %1294 = vmatpush1.msra.mxu0 %v1251
  %1295 = vmatprep.subr.mxu0 %v1256
  %1296 = vmatpush1.msra.mxu0 %v1255
  %1297 = vmatprep.subr.mxu0 %v1260
  %1298 = vmatpush1.msra.mxu0 %v1259
  %1299 = vmatprep.subr.mxu0 %v1264
  %1300 = vmatpush1.msra.mxu0 %v1263
  %1301 = vmatprep.subr.mxu0 %v1268
  %1302 = vmatpush1.msra.mxu0 %v1267
  %1303 = vmatprep.subr.mxu0 0.0
  %1304 = vmatpush1.msra.mxu0 0.0
  %1305 = vmatprep.subr.mxu0 0.0
  %1306 = vmatpush1.msra.mxu0 0.0
  %1307 = vmatprep.subr.mxu0 0.0
  %1308 = vmatpush1.msra.mxu0 0.0
  %1309 = vmatprep.subr.mxu0 0.0
  %1310 = vmatpush1.msra.mxu0 0.0
  %1311 = vmatprep.subr.mxu0 0.0
  %1312 = vmatpush1.msra.mxu0 0.0
  %1313 = vmatprep.subr.mxu0 0.0
  %1314 = vmatpush1.msra.mxu0 0.0
  %1315 = vmatprep.subr.mxu0 0.0
  %1316 = vmatpush1.msra.mxu0 0.0
  %1317 = vmatprep.subr.mxu0 0.0
  %1318 = vmatpush1.msra.mxu0 0.0
  %1319 = vmatprep.subr.mxu0 0.0
  %1320 = vmatpush1.msra.mxu0 0.0
  %1321 = vmatprep.subr.mxu0 0.0
  %1322 = vmatpush1.msra.mxu0 0.0
  %1323 = vmatprep.subr.mxu0 0.0
  %1324 = vmatpush1.msra.mxu0 0.0
  %1325 = vmatprep.subr.mxu0 0.0
  %1326 = vmatpush1.msra.mxu0 0.0
  %1327 = vmatprep.subr.mxu0 0.0
  %1328 = vmatpush1.msra.mxu0 0.0
  %1329 = vmatprep.subr.mxu0 0.0
  %1330 = vmatpush1.msra.mxu0 0.0
  %1331 = vmatprep.subr.mxu0 0.0
  %1332 = vmatpush1.msra.mxu0 0.0
  %1333 = vmatprep.subr.mxu0 0.0
  %1334 = vmatpush1.msra.mxu0 0.0
  %1335 = vmatprep.mubr.f32.mxu0 0.0
  %1336 = vmatmul.mubr.f32.gmra.mrb[0].mxu0 %v1199
  %v1337 = vpop.f32.mrb[0].mxu0
  %v1338 = vadd.f32 0.0, %v1337
  %v1339 = vpop.f32.mrb[0].mxu0
  %v1340 = vadd.f32 0.0, %v1339
  %1341 = vdwg.mxu0
  %1342 = vmatprep.subr.mxu0 %v1210
  %1343 = vmatpush1.msra.mxu0 %v1209
  %1344 = vmatprep.subr.mxu0 %v1214
  %1345 = vmatpush1.msra.mxu0 %v1213
  %1346 = vmatprep.subr.mxu0 %v1218
  %1347 = vmatpush1.msra.mxu0 %v1217
  %1348 = vmatprep.subr.mxu0 %v1222
  %1349 = vmatpush1.msra.mxu0 %v1221
  %1350 = vmatprep.subr.mxu0 %v1226
  %1351 = vmatpush1.msra.mxu0 %v1225
  %1352 = vmatprep.subr.mxu0 %v1230
  %1353 = vmatpush1.msra.mxu0 %v1229
  %1354 = vmatprep.subr.mxu0 %v1234
  %1355 = vmatpush1.msra.mxu0 %v1233
  %1356 = vmatprep.subr.mxu0 %v1238
  %1357 = vmatpush1.msra.mxu0 %v1237
  %1358 = vmatprep.subr.mxu0 %v1242
  %1359 = vmatpush1.msra.mxu0 %v1241
  %1360 = vmatprep.subr.mxu0 %v1246
  %1361 = vmatpush1.msra.mxu0 %v1245
  %1362 = vmatprep.subr.mxu0 %v1250
  %1363 = vmatpush1.msra.mxu0 %v1249
  %1364 = vmatprep.subr.mxu0 %v1254
  %1365 = vmatpush1.msra.mxu0 %v1253
  %1366 = vmatprep.subr.mxu0 %v1258
  %1367 = vmatpush1.msra.mxu0 %v1257
  %1368 = vmatprep.subr.mxu0 %v1262
  %1369 = vmatpush1.msra.mxu0 %v1261
  %1370 = vmatprep.subr.mxu0 %v1266
  %1371 = vmatpush1.msra.mxu0 %v1265
  %1372 = vmatprep.subr.mxu0 %v1270
  %1373 = vmatpush1.msra.mxu0 %v1269
  %1374 = vmatprep.subr.mxu0 0.0
  %1375 = vmatpush1.msra.mxu0 0.0
  %1376 = vmatprep.subr.mxu0 0.0
  %1377 = vmatpush1.msra.mxu0 0.0
  %1378 = vmatprep.subr.mxu0 0.0
  %1379 = vmatpush1.msra.mxu0 0.0
  %1380 = vmatprep.subr.mxu0 0.0
  %1381 = vmatpush1.msra.mxu0 0.0
  %1382 = vmatprep.subr.mxu0 0.0
  %1383 = vmatpush1.msra.mxu0 0.0
  %1384 = vmatprep.subr.mxu0 0.0
  %1385 = vmatpush1.msra.mxu0 0.0
  %1386 = vmatprep.subr.mxu0 0.0
  %1387 = vmatpush1.msra.mxu0 0.0
  %1388 = vmatprep.subr.mxu0 0.0
  %1389 = vmatpush1.msra.mxu0 0.0
  %1390 = vmatprep.subr.mxu0 0.0
  %1391 = vmatpush1.msra.mxu0 0.0
  %1392 = vmatprep.subr.mxu0 0.0
  %1393 = vmatpush1.msra.mxu0 0.0
  %1394 = vmatprep.subr.mxu0 0.0
  %1395 = vmatpush1.msra.mxu0 0.0
  %1396 = vmatprep.subr.mxu0 0.0
  %1397 = vmatpush1.msra.mxu0 0.0
  %1398 = vmatprep.subr.mxu0 0.0
  %1399 = vmatpush1.msra.mxu0 0.0
  %1400 = vmatprep.subr.mxu0 0.0
  %1401 = vmatpush1.msra.mxu0 0.0
  %1402 = vmatprep.subr.mxu0 0.0
  %1403 = vmatpush1.msra.mxu0 0.0
  %1404 = vmatprep.subr.mxu0 0.0
  %1405 = vmatpush1.msra.mxu0 0.0
  %1406 = vmatprep.mubr.f32.mxu0 0.0
  %1407 = vmatmul.mubr.f32.gmra.mrb[0].mxu0 %v1199
  %v1408 = vpop.f32.mrb[0].mxu0
  %v1409 = vadd.f32 0.0, %v1408
  %v1410 = vpop.f32.mrb[0].mxu0
  %v1411 = vadd.f32 0.0, %v1410
  %1412 = vdwg.mxu0
  %v1413 = vadd.f32 %v1203, %v1338
  %v1414 = vadd.f32 %v1204, %v1340
  %v1415 = vadd.f32 %v1205, %v1409
  %v1416 = vadd.f32 %v1206, %v1411
  %v1417 = vmul.f32 %v1413, 0.5
  %v1418 = vmul.f32 %v1414, 0.5
  %v1419 = vmul.f32 %v1415, 0.5
  %v1420 = vtanh.pop %v1417
  %v1421 = vtanh.pop %v1418
  %v1422 = vtanh.pop %v1419
  %v1423 = vmul.f32 %v1420, 0.5
  %v1424 = vmul.f32 %v1421, 0.5
  %v1425 = vmul.f32 %v1422, 0.5
  %v1426 = vadd.f32 %v1423, 0.5
  %v1427 = vadd.f32 %v1424, 0.5
  %v1428 = vadd.f32 %v1425, 0.5
  %v1429 = vtanh.pop %v1416
  %v1430 = vmul.f32 %v1427, %v1197
  %v1431 = vmul.f32 %v1426, %v1429
  %v1432 = vadd.f32 %v1430, %v1431
  %v1433 = vtanh.pop %v1432
  %v1434 = vmul.f32 %v1428, %v1433
  %s1435 = scalar_lea.vmem %s4, 40
  %1436 = vst [vmem:[%s1435] sm:$0xff] %v1434
  %s1437 = scalar_lea.vmem %s0, 192
  %v1438 = vld [vmem:[%s1437] sm:$0xff]
  %v1439 = vld [vmem:[%s1437 + $0x8] sm:$0xff]
  %v1440 = vld [vmem:[%s1437 + $0x10] sm:$0xff]
  %v1441 = vld [vmem:[%s1437 + $0x18] sm:$0xff]
  %v1442 = vld [vmem:[%s1] sm:$0xff]
  %v1443 = vld [vmem:[%s1 + $0x8] sm:$0xff]
  %v1444 = vld [vmem:[%s1 + $0x10] sm:$0xff]
  %v1445 = vld [vmem:[%s1 + $0x18] sm:$0xff]
  %v1446 = vld [vmem:[%s1 + $0x20] sm:$0xff]
  %v1447 = vld [vmem:[%s1 + $0x28] sm:$0xff]
  %v1448 = vld [vmem:[%s1 + $0x30] sm:$0xff]
  %v1449 = vld [vmem:[%s1 + $0x38] sm:$0xff]
  %v1450 = vld [vmem:[%s1 + $0x40] sm:$0xff]
  %v1451 = vld [vmem:[%s1 + $0x48] sm:$0xff]
  %v1452 = vld [vmem:[%s1 + $0x50] sm:$0xff]
  %v1453 = vld [vmem:[%s1 + $0x58] sm:$0xff]
  %v1454 = vld [vmem:[%s1 + $0x60] sm:$0xff]
  %v1455 = vld [vmem:[%s1 + $0x68] sm:$0xff]
  %v1456 = vld [vmem:[%s1 + $0x70] sm:$0xff]
  %v1457 = vld [vmem:[%s1 + $0x78] sm:$0xff]
  %v1458 = vld [vmem:[%s1 + $0x80] sm:$0xff]
  %v1459 = vld [vmem:[%s1 + $0x88] sm:$0xff]
  %v1460 = vld [vmem:[%s1 + $0x90] sm:$0xff]
  %v1461 = vld [vmem:[%s1 + $0x98] sm:$0xff]
  %v1462 = vld [vmem:[%s1 + $0xa0] sm:$0xff]
  %v1463 = vld [vmem:[%s1 + $0xa8] sm:$0xff]
  %v1464 = vld [vmem:[%s1 + $0xb0] sm:$0xff]
  %v1465 = vld [vmem:[%s1 + $0xb8] sm:$0xff]
  %v1466 = vld [vmem:[%s1 + $0xc0] sm:$0xff]
  %v1467 = vld [vmem:[%s1 + $0xc8] sm:$0xff]
  %v1468 = vld [vmem:[%s1 + $0xd0] sm:$0xff]
  %v1469 = vld [vmem:[%s1 + $0xd8] sm:$0xff]
  %v1470 = vld [vmem:[%s1 + $0xe0] sm:$0xff]
  %v1471 = vld [vmem:[%s1 + $0xe8] sm:$0xff]
  %v1472 = vld [vmem:[%s1 + $0xf0] sm:$0xff]
  %v1473 = vld [vmem:[%s1 + $0xf8] sm:$0xff]
  %v1474 = vld [vmem:[%s1 + $0x100] sm:$0xff]
  %v1475 = vld [vmem:[%s1 + $0x108] sm:$0xff]
  %v1476 = vld [vmem:[%s1 + $0x110] sm:$0xff]
  %v1477 = vld [vmem:[%s1 + $0x118] sm:$0xff]
  %v1478 = vld [vmem:[%s1 + $0x120] sm:$0xff]
  %v1479 = vld [vmem:[%s1 + $0x128] sm:$0xff]
  %v1480 = vld [vmem:[%s1 + $0x130] sm:$0xff]
  %v1481 = vld [vmem:[%s1 + $0x138] sm:$0xff]
  %v1482 = vld [vmem:[%s1 + $0x140] sm:$0xff]
  %v1483 = vld [vmem:[%s1 + $0x148] sm:$0xff]
  %v1484 = vld [vmem:[%s1 + $0x150] sm:$0xff]
  %v1485 = vld [vmem:[%s1 + $0x158] sm:$0xff]
  %v1486 = vld [vmem:[%s1 + $0x160] sm:$0xff]
  %v1487 = vld [vmem:[%s1 + $0x168] sm:$0xff]
  %v1488 = vld [vmem:[%s1 + $0x170] sm:$0xff]
  %v1489 = vld [vmem:[%s1 + $0x178] sm:$0xff]
  %v1490 = vld [vmem:[%s1 + $0x180] sm:$0xff]
  %v1491 = vld [vmem:[%s1 + $0x188] sm:$0xff]
  %v1492 = vld [vmem:[%s1 + $0x190] sm:$0xff]
  %v1493 = vld [vmem:[%s1 + $0x198] sm:$0xff]
  %v1494 = vld [vmem:[%s1 + $0x1a0] sm:$0xff]
  %v1495 = vld [vmem:[%s1 + $0x1a8] sm:$0xff]
  %v1496 = vld [vmem:[%s1 + $0x1b0] sm:$0xff]
  %v1497 = vld [vmem:[%s1 + $0x1b8] sm:$0xff]
  %v1498 = vld [vmem:[%s1 + $0x1c0] sm:$0xff]
  %v1499 = vld [vmem:[%s1 + $0x1c8] sm:$0xff]
  %v1500 = vld [vmem:[%s1 + $0x1d0] sm:$0xff]
  %v1501 = vld [vmem:[%s1 + $0x1d8] sm:$0xff]
  %v1502 = vld [vmem:[%s1 + $0x1e0] sm:$0xff]
  %v1503 = vld [vmem:[%s1 + $0x1e8] sm:$0xff]
  %v1504 = vld [vmem:[%s1 + $0x1f0] sm:$0xff]
  %v1505 = vld [vmem:[%s1 + $0x1f8] sm:$0xff]
  %1506 = vmatprep.subr.mxu0 %v1443
  %1507 = vmatpush1.msra.mxu0 %v1442
  %1508 = vmatprep.subr.mxu0 %v1447
  %1509 = vmatpush1.msra.mxu0 %v1446
  %1510 = vmatprep.subr.mxu0 %v1451
  %1511 = vmatpush1.msra.mxu0 %v1450
  %1512 = vmatprep.subr.mxu0 %v1455
  %1513 = vmatpush1.msra.mxu0 %v1454
  %1514 = vmatprep.subr.mxu0 %v1459
  %1515 = vmatpush1.msra.mxu0 %v1458
  %1516 = vmatprep.subr.mxu0 %v1463
  %1517 = vmatpush1.msra.mxu0 %v1462
  %1518 = vmatprep.subr.mxu0 %v1467
  %1519 = vmatpush1.msra.mxu0 %v1466
  %1520 = vmatprep.subr.mxu0 %v1471
  %1521 = vmatpush1.msra.mxu0 %v1470
  %1522 = vmatprep.subr.mxu0 %v1475
  %1523 = vmatpush1.msra.mxu0 %v1474
  %1524 = vmatprep.subr.mxu0 %v1479
  %1525 = vmatpush1.msra.mxu0 %v1478
  %1526 = vmatprep.subr.mxu0 %v1483
  %1527 = vmatpush1.msra.mxu0 %v1482
  %1528 = vmatprep.subr.mxu0 %v1487
  %1529 = vmatpush1.msra.mxu0 %v1486
  %1530 = vmatprep.subr.mxu0 %v1491
  %1531 = vmatpush1.msra.mxu0 %v1490
  %1532 = vmatprep.subr.mxu0 %v1495
  %1533 = vmatpush1.msra.mxu0 %v1494
  %1534 = vmatprep.subr.mxu0 %v1499
  %1535 = vmatpush1.msra.mxu0 %v1498
  %1536 = vmatprep.subr.mxu0 %v1503
  %1537 = vmatpush1.msra.mxu0 %v1502
  %1538 = vmatprep.subr.mxu0 0.0
  %1539 = vmatpush1.msra.mxu0 0.0
  %1540 = vmatprep.subr.mxu0 0.0
  %1541 = vmatpush1.msra.mxu0 0.0
  %1542 = vmatprep.subr.mxu0 0.0
  %1543 = vmatpush1.msra.mxu0 0.0
  %1544 = vmatprep.subr.mxu0 0.0
  %1545 = vmatpush1.msra.mxu0 0.0
  %1546 = vmatprep.subr.mxu0 0.0
  %1547 = vmatpush1.msra.mxu0 0.0
  %1548 = vmatprep.subr.mxu0 0.0
  %1549 = vmatpush1.msra.mxu0 0.0
  %1550 = vmatprep.subr.mxu0 0.0
  %1551 = vmatpush1.msra.mxu0 0.0
  %1552 = vmatprep.subr.mxu0 0.0
  %1553 = vmatpush1.msra.mxu0 0.0
  %1554 = vmatprep.subr.mxu0 0.0
  %1555 = vmatpush1.msra.mxu0 0.0
  %1556 = vmatprep.subr.mxu0 0.0
  %1557 = vmatpush1.msra.mxu0 0.0
  %1558 = vmatprep.subr.mxu0 0.0
  %1559 = vmatpush1.msra.mxu0 0.0
  %1560 = vmatprep.subr.mxu0 0.0
  %1561 = vmatpush1.msra.mxu0 0.0
  %1562 = vmatprep.subr.mxu0 0.0
  %1563 = vmatpush1.msra.mxu0 0.0
  %1564 = vmatprep.subr.mxu0 0.0
  %1565 = vmatpush1.msra.mxu0 0.0
  %1566 = vmatprep.subr.mxu0 0.0
  %1567 = vmatpush1.msra.mxu0 0.0
  %1568 = vmatprep.subr.mxu0 0.0
  %1569 = vmatpush1.msra.mxu0 0.0
  %1570 = vmatprep.mubr.f32.mxu0 0.0
  %1571 = vmatmul.mubr.f32.gmra.mrb[0].mxu0 %v1434
  %v1572 = vpop.f32.mrb[0].mxu0
  %v1573 = vadd.f32 0.0, %v1572
  %v1574 = vpop.f32.mrb[0].mxu0
  %v1575 = vadd.f32 0.0, %v1574
  %1576 = vdwg.mxu0
  %1577 = vmatprep.subr.mxu0 %v1445
  %1578 = vmatpush1.msra.mxu0 %v1444
  %1579 = vmatprep.subr.mxu0 %v1449
  %1580 = vmatpush1.msra.mxu0 %v1448
  %1581 = vmatprep.subr.mxu0 %v1453
  %1582 = vmatpush1.msra.mxu0 %v1452
  %1583 = vmatprep.subr.mxu0 %v1457
  %1584 = vmatpush1.msra.mxu0 %v1456
  %1585 = vmatprep.subr.mxu0 %v1461
  %1586 = vmatpush1.msra.mxu0 %v1460
  %1587 = vmatprep.subr.mxu0 %v1465
  %1588 = vmatpush1.msra.mxu0 %v1464
  %1589 = vmatprep.subr.mxu0 %v1469
  %1590 = vmatpush1.msra.mxu0 %v1468
  %1591 = vmatprep.subr.mxu0 %v1473
  %1592 = vmatpush1.msra.mxu0 %v1472
  %1593 = vmatprep.subr.mxu0 %v1477
  %1594 = vmatpush1.msra.mxu0 %v1476
  %1595 = vmatprep.subr.mxu0 %v1481
  %1596 = vmatpush1.msra.mxu0 %v1480
  %1597 = vmatprep.subr.mxu0 %v1485
  %1598 = vmatpush1.msra.mxu0 %v1484
  %1599 = vmatprep.subr.mxu0 %v1489
  %1600 = vmatpush1.msra.mxu0 %v1488
  %1601 = vmatprep.subr.mxu0 %v1493
  %1602 = vmatpush1.msra.mxu0 %v1492
  %1603 = vmatprep.subr.mxu0 %v1497
  %1604 = vmatpush1.msra.mxu0 %v1496
  %1605 = vmatprep.subr.mxu0 %v1501
  %1606 = vmatpush1.msra.mxu0 %v1500
  %1607 = vmatprep.subr.mxu0 %v1505
  %1608 = vmatpush1.msra.mxu0 %v1504
  %1609 = vmatprep.subr.mxu0 0.0
  %1610 = vmatpush1.msra.mxu0 0.0
  %1611 = vmatprep.subr.mxu0 0.0
  %1612 = vmatpush1.msra.mxu0 0.0
  %1613 = vmatprep.subr.mxu0 0.0
  %1614 = vmatpush1.msra.mxu0 0.0
  %1615 = vmatprep.subr.mxu0 0.0
  %1616 = vmatpush1.msra.mxu0 0.0
  %1617 = vmatprep.subr.mxu0 0.0
  %1618 = vmatpush1.msra.mxu0 0.0
  %1619 = vmatprep.subr.mxu0 0.0
  %1620 = vmatpush1.msra.mxu0 0.0
  %1621 = vmatprep.subr.mxu0 0.0
  %1622 = vmatpush1.msra.mxu0 0.0
  %1623 = vmatprep.subr.mxu0 0.0
  %1624 = vmatpush1.msra.mxu0 0.0
  %1625 = vmatprep.subr.mxu0 0.0
  %1626 = vmatpush1.msra.mxu0 0.0
  %1627 = vmatprep.subr.mxu0 0.0
  %1628 = vmatpush1.msra.mxu0 0.0
  %1629 = vmatprep.subr.mxu0 0.0
  %1630 = vmatpush1.msra.mxu0 0.0
  %1631 = vmatprep.subr.mxu0 0.0
  %1632 = vmatpush1.msra.mxu0 0.0
  %1633 = vmatprep.subr.mxu0 0.0
  %1634 = vmatpush1.msra.mxu0 0.0
  %1635 = vmatprep.subr.mxu0 0.0
  %1636 = vmatpush1.msra.mxu0 0.0
  %1637 = vmatprep.subr.mxu0 0.0
  %1638 = vmatpush1.msra.mxu0 0.0
  %1639 = vmatprep.subr.mxu0 0.0
  %1640 = vmatpush1.msra.mxu0 0.0
  %1641 = vmatprep.mubr.f32.mxu0 0.0
  %1642 = vmatmul.mubr.f32.gmra.mrb[0].mxu0 %v1434
  %v1643 = vpop.f32.mrb[0].mxu0
  %v1644 = vadd.f32 0.0, %v1643
  %v1645 = vpop.f32.mrb[0].mxu0
  %v1646 = vadd.f32 0.0, %v1645
  %1647 = vdwg.mxu0
  %v1648 = vadd.f32 %v1438, %v1573
  %v1649 = vadd.f32 %v1439, %v1575
  %v1650 = vadd.f32 %v1440, %v1644
  %v1651 = vadd.f32 %v1441, %v1646
  %v1652 = vmul.f32 %v1648, 0.5
  %v1653 = vmul.f32 %v1649, 0.5
  %v1654 = vmul.f32 %v1650, 0.5
  %v1655 = vtanh.pop %v1652
  %v1656 = vtanh.pop %v1653
  %v1657 = vtanh.pop %v1654
  %v1658 = vmul.f32 %v1655, 0.5
  %v1659 = vmul.f32 %v1656, 0.5
  %v1660 = vmul.f32 %v1657, 0.5
  %v1661 = vadd.f32 %v1658, 0.5
  %v1662 = vadd.f32 %v1659, 0.5
  %v1663 = vadd.f32 %v1660, 0.5
  %v1664 = vtanh.pop %v1651
  %v1665 = vmul.f32 %v1662, %v1432
  %v1666 = vmul.f32 %v1661, %v1664
  %v1667 = vadd.f32 %v1665, %v1666
  %v1668 = vtanh.pop %v1667
  %v1669 = vmul.f32 %v1663, %v1668
  %s1670 = scalar_lea.vmem %s4, 48
  %1671 = vst [vmem:[%s1670] sm:$0xff] %v1669
  %s1672 = scalar_lea.vmem %s0, 224
  %v1673 = vld [vmem:[%s1672] sm:$0xff]
  %v1674 = vld [vmem:[%s1672 + $0x8] sm:$0xff]
  %v1675 = vld [vmem:[%s1672 + $0x10] sm:$0xff]
  %v1676 = vld [vmem:[%s1672 + $0x18] sm:$0xff]
  %v1677 = vld [vmem:[%s1] sm:$0xff]
  %v1678 = vld [vmem:[%s1 + $0x8] sm:$0xff]
  %v1679 = vld [vmem:[%s1 + $0x10] sm:$0xff]
  %v1680 = vld [vmem:[%s1 + $0x18] sm:$0xff]
  %v1681 = vld [vmem:[%s1 + $0x20] sm:$0xff]
  %v1682 = vld [vmem:[%s1 + $0x28] sm:$0xff]
  %v1683 = vld [vmem:[%s1 + $0x30] sm:$0xff]
  %v1684 = vld [vmem:[%s1 + $0x38] sm:$0xff]
  %v1685 = vld [vmem:[%s1 + $0x40] sm:$0xff]
  %v1686 = vld [vmem:[%s1 + $0x48] sm:$0xff]
  %v1687 = vld [vmem:[%s1 + $0x50] sm:$0xff]
  %v1688 = vld [vmem:[%s1 + $0x58] sm:$0xff]
  %v1689 = vld [vmem:[%s1 + $0x60] sm:$0xff]
  %v1690 = vld [vmem:[%s1 + $0x68] sm:$0xff]
  %v1691 = vld [vmem:[%s1 + $0x70] sm:$0xff]
  %v1692 = vld [vmem:[%s1 + $0x78] sm:$0xff]
  %v1693 = vld [vmem:[%s1 + $0x80] sm:$0xff]
  %v1694 = vld [vmem:[%s1 + $0x88] sm:$0xff]
  %v1695 = vld [vmem:[%s1 + $0x90] sm:$0xff]
  %v1696 = vld [vmem:[%s1 + $0x98] sm:$0xff]
  %v1697 = vld [vmem:[%s1 + $0xa0] sm:$0xff]
  %v1698 = vld [vmem:[%s1 + $0xa8] sm:$0xff]
  %v1699 = vld [vmem:[%s1 + $0xb0] sm:$0xff]
  %v1700 = vld [vmem:[%s1 + $0xb8] sm:$0xff]
  %v1701 = vld [vmem:[%s1 + $0xc0] sm:$0xff]
  %v1702 = vld [vmem:[%s1 + $0xc8] sm:$0xff]
  %v1703 = vld [vmem:[%s1 + $0xd0] sm:$0xff]
  %v1704 = vld [vmem:[%s1 + $0xd8] sm:$0xff]
  %v1705 = vld [vmem:[%s1 + $0xe0] sm:$0xff]
  %v1706 = vld [vmem:[%s1 + $0xe8] sm:$0xff]
  %v1707 = vld [vmem:[%s1 + $0xf0] sm:$0xff]
  %v1708 = vld [vmem:[%s1 + $0xf8] sm:$0xff]
  %v1709 = vld [vmem:[%s1 + $0x100] sm:$0xff]
  %v1710 = vld [vmem:[%s1 + $0x108] sm:$0xff]
  %v1711 = vld [vmem:[%s1 + $0x110] sm:$0xff]
  %v1712 = vld [vmem:[%s1 + $0x118] sm:$0xff]
  %v1713 = vld [vmem:[%s1 + $0x120] sm:$0xff]
  %v1714 = vld [vmem:[%s1 + $0x128] sm:$0xff]
  %v1715 = vld [vmem:[%s1 + $0x130] sm:$0xff]
  %v1716 = vld [vmem:[%s1 + $0x138] sm:$0xff]
  %v1717 = vld [vmem:[%s1 + $0x140] sm:$0xff]
  %v1718 = vld [vmem:[%s1 + $0x148] sm:$0xff]
  %v1719 = vld [vmem:[%s1 + $0x150] sm:$0xff]
  %v1720 = vld [vmem:[%s1 + $0x158] sm:$0xff]
  %v1721 = vld [vmem:[%s1 + $0x160] sm:$0xff]
  %v1722 = vld [vmem:[%s1 + $0x168] sm:$0xff]
  %v1723 = vld [vmem:[%s1 + $0x170] sm:$0xff]
  %v1724 = vld [vmem:[%s1 + $0x178] sm:$0xff]
  %v1725 = vld [vmem:[%s1 + $0x180] sm:$0xff]
  %v1726 = vld [vmem:[%s1 + $0x188] sm:$0xff]
  %v1727 = vld [vmem:[%s1 + $0x190] sm:$0xff]
  %v1728 = vld [vmem:[%s1 + $0x198] sm:$0xff]
  %v1729 = vld [vmem:[%s1 + $0x1a0] sm:$0xff]
  %v1730 = vld [vmem:[%s1 + $0x1a8] sm:$0xff]
  %v1731 = vld [vmem:[%s1 + $0x1b0] sm:$0xff]
  %v1732 = vld [vmem:[%s1 + $0x1b8] sm:$0xff]
  %v1733 = vld [vmem:[%s1 + $0x1c0] sm:$0xff]
  %v1734 = vld [vmem:[%s1 + $0x1c8] sm:$0xff]
  %v1735 = vld [vmem:[%s1 + $0x1d0] sm:$0xff]
  %v1736 = vld [vmem:[%s1 + $0x1d8] sm:$0xff]
  %v1737 = vld [vmem:[%s1 + $0x1e0] sm:$0xff]
  %v1738 = vld [vmem:[%s1 + $0x1e8] sm:$0xff]
  %v1739 = vld [vmem:[%s1 + $0x1f0] sm:$0xff]
  %v1740 = vld [vmem:[%s1 + $0x1f8] sm:$0xff]
  %1741 = vmatprep.subr.mxu0 %v1678
  %1742 = vmatpush1.msra.mxu0 %v1677
  %1743 = vmatprep.subr.mxu0 %v1682
  %1744 = vmatpush1.msra.mxu0 %v1681
  %1745 = vmatprep.subr.mxu0 %v1686
  %1746 = vmatpush1.msra.mxu0 %v1685
  %1747 = vmatprep.subr.mxu0 %v1690
  %1748 = vmatpush1.msra.mxu0 %v1689
  %1749 = vmatprep.subr.mxu0 %v1694
  %1750 = vmatpush1.msra.mxu0 %v1693
  %1751 = vmatprep.subr.mxu0 %v1698
  %1752 = vmatpush1.msra.mxu0 %v1697
  %1753 = vmatprep.subr.mxu0 %v1702
  %1754 = vmatpush1.msra.mxu0 %v1701
  %1755 = vmatprep.subr.mxu0 %v1706
  %1756 = vmatpush1.msra.mxu0 %v1705
  %1757 = vmatprep.subr.mxu0 %v1710
  %1758 = vmatpush1.msra.mxu0 %v1709
  %1759 = vmatprep.subr.mxu0 %v1714
  %1760 = vmatpush1.msra.mxu0 %v1713
  %1761 = vmatprep.subr.mxu0 %v1718
  %1762 = vmatpush1.msra.mxu0 %v1717
  %1763 = vmatprep.subr.mxu0 %v1722
  %1764 = vmatpush1.msra.mxu0 %v1721
  %1765 = vmatprep.subr.mxu0 %v1726
  %1766 = vmatpush1.msra.mxu0 %v1725
  %1767 = vmatprep.subr.mxu0 %v1730
  %1768 = vmatpush1.msra.mxu0 %v1729
  %1769 = vmatprep.subr.mxu0 %v1734
  %1770 = vmatpush1.msra.mxu0 %v1733
  %1771 = vmatprep.subr.mxu0 %v1738
  %1772 = vmatpush1.msra.mxu0 %v1737
  %1773 = vmatprep.subr.mxu0 0.0
  %1774 = vmatpush1.msra.mxu0 0.0
  %1775 = vmatprep.subr.mxu0 0.0
  %1776 = vmatpush1.msra.mxu0 0.0
  %1777 = vmatprep.subr.mxu0 0.0
  %1778 = vmatpush1.msra.mxu0 0.0
  %1779 = vmatprep.subr.mxu0 0.0
  %1780 = vmatpush1.msra.mxu0 0.0
  %1781 = vmatprep.subr.mxu0 0.0
  %1782 = vmatpush1.msra.mxu0 0.0
  %1783 = vmatprep.subr.mxu0 0.0
  %1784 = vmatpush1.msra.mxu0 0.0
  %1785 = vmatprep.subr.mxu0 0.0
  %1786 = vmatpush1.msra.mxu0 0.0
  %1787 = vmatprep.subr.mxu0 0.0
  %1788 = vmatpush1.msra.mxu0 0.0
  %1789 = vmatprep.subr.mxu0 0.0
  %1790 = vmatpush1.msra.mxu0 0.0
  %1791 = vmatprep.subr.mxu0 0.0
  %1792 = vmatpush1.msra.mxu0 0.0
  %1793 = vmatprep.subr.mxu0 0.0
  %1794 = vmatpush1.msra.mxu0 0.0
  %1795 = vmatprep.subr.mxu0 0.0
  %1796 = vmatpush1.msra.mxu0 0.0
  %1797 = vmatprep.subr.mxu0 0.0
  %1798 = vmatpush1.msra.mxu0 0.0
  %1799 = vmatprep.subr.mxu0 0.0
  %1800 = vmatpush1.msra.mxu0 0.0
  %1801 = vmatprep.subr.mxu0 0.0
  %1802 = vmatpush1.msra.mxu0 0.0
  %1803 = vmatprep.subr.mxu0 0.0
  %1804 = vmatpush1.msra.mxu0 0.0
  %1805 = vmatprep.mubr.f32.mxu0 0.0
  %1806 = vmatmul.mubr.f32.gmra.mrb[0].mxu0 %v1669
  %v1807 = vpop.f32.mrb[0].mxu0
  %v1808 = vadd.f32 0.0, %v1807
  %v1809 = vpop.f32.mrb[0].mxu0
  %v1810 = vadd.f32 0.0, %v1809
  %1811 = vdwg.mxu0
  %1812 = vmatprep.subr.mxu0 %v1680
  %1813 = vmatpush1.msra.mxu0 %v1679
  %1814 = vmatprep.subr.mxu0 %v1684
  %1815 = vmatpush1.msra.mxu0 %v1683
  %1816 = vmatprep.subr.mxu0 %v1688
  %1817 = vmatpush1.msra.mxu0 %v1687
  %1818 = vmatprep.subr.mxu0 %v1692
  %1819 = vmatpush1.msra.mxu0 %v1691
  %1820 = vmatprep.subr.mxu0 %v1696
  %1821 = vmatpush1.msra.mxu0 %v1695
  %1822 = vmatprep.subr.mxu0 %v1700
  %1823 = vmatpush1.msra.mxu0 %v1699
  %1824 = vmatprep.subr.mxu0 %v1704
  %1825 = vmatpush1.msra.mxu0 %v1703
  %1826 = vmatprep.subr.mxu0 %v1708
  %1827 = vmatpush1.msra.mxu0 %v1707
  %1828 = vmatprep.subr.mxu0 %v1712
  %1829 = vmatpush1.msra.mxu0 %v1711
  %1830 = vmatprep.subr.mxu0 %v1716
  %1831 = vmatpush1.msra.mxu0 %v1715
  %1832 = vmatprep.subr.mxu0 %v1720
  %1833 = vmatpush1.msra.mxu0 %v1719
  %1834 = vmatprep.subr.mxu0 %v1724
  %1835 = vmatpush1.msra.mxu0 %v1723
  %1836 = vmatprep.subr.mxu0 %v1728
  %1837 = vmatpush1.msra.mxu0 %v1727
  %1838 = vmatprep.subr.mxu0 %v1732
  %1839 = vmatpush1.msra.mxu0 %v1731
  %1840 = vmatprep.subr.mxu0 %v1736
  %1841 = vmatpush1.msra.mxu0 %v1735
  %1842 = vmatprep.subr.mxu0 %v1740
  %1843 = vmatpush1.msra.mxu0 %v1739
  %1844 = vmatprep.subr.mxu0 0.0
  %1845 = vmatpush1.msra.mxu0 0.0
  %1846 = vmatprep.subr.mxu0 0.0
  %1847 = vmatpush1.msra.mxu0 0.0
  %1848 = vmatprep.subr.mxu0 0.0
  %1849 = vmatpush1.msra.mxu0 0.0
  %1850 = vmatprep.subr.mxu0 0.0
  %1851 = vmatpush1.msra.mxu0 0.0
  %1852 = vmatprep.subr.mxu0 0.0
  %1853 = vmatpush1.msra.mxu0 0.0
  %1854 = vmatprep.subr.mxu0 0.0
  %1855 = vmatpush1.msra.mxu0 0.0
  %1856 = vmatprep.subr.mxu0 0.0
  %1857 = vmatpush1.msra.mxu0 0.0
  %1858 = vmatprep.subr.mxu0 0.0
  %1859 = vmatpush1.msra.mxu0 0.0
  %1860 = vmatprep.subr.mxu0 0.0
  %1861 = vmatpush1.msra.mxu0 0.0
  %1862 = vmatprep.subr.mxu0 0.0
  %1863 = vmatpush1.msra.mxu0 0.0
  %1864 = vmatprep.subr.mxu0 0.0
  %1865 = vmatpush1.msra.mxu0 0.0
  %1866 = vmatprep.subr.mxu0 0.0
  %1867 = vmatpush1.msra.mxu0 0.0
  %1868 = vmatprep.subr.mxu0 0.0
  %1869 = vmatpush1.msra.mxu0 0.0
  %1870 = vmatprep.subr.mxu0 0.0
  %1871 = vmatpush1.msra.mxu0 0.0
  %1872 = vmatprep.subr.mxu0 0.0
  %1873 = vmatpush1.msra.mxu0 0.0
  %1874 = vmatprep.subr.mxu0 0.0
  %1875 = vmatpush1.msra.mxu0 0.0
  %1876 = vmatprep.mubr.f32.mxu0 0.0
  %1877 = vmatmul.mubr.f32.gmra.mrb[0].mxu0 %v1669
  %v1878 = vpop.f32.mrb[0].mxu0
  %v1879 = vadd.f32 0.0, %v1878
  %v1880 = vpop.f32.mrb[0].mxu0
  %v1881 = vadd.f32 0.0, %v1880
  %1882 = vdwg.mxu0
  %v1883 = vadd.f32 %v1673, %v1808
  %v1884 = vadd.f32 %v1674, %v1810
  %v1885 = vadd.f32 %v1675, %v1879
  %v1886 = vadd.f32 %v1676, %v1881
  %v1887 = vmul.f32 %v1883, 0.5
  %v1888 = vmul.f32 %v1884, 0.5
  %v1889 = vmul.f32 %v1885, 0.5
  %v1890 = vtanh.pop %v1887
  %v1891 = vtanh.pop %v1888
  %v1892 = vtanh.pop %v1889
  %v1893 = vmul.f32 %v1890, 0.5
  %v1894 = vmul.f32 %v1891, 0.5
  %v1895 = vmul.f32 %v1892, 0.5
  %v1896 = vadd.f32 %v1893, 0.5
  %v1897 = vadd.f32 %v1894, 0.5
  %v1898 = vadd.f32 %v1895, 0.5
  %v1899 = vtanh.pop %v1886
  %v1900 = vmul.f32 %v1897, %v1667
  %v1901 = vmul.f32 %v1896, %v1899
  %v1902 = vadd.f32 %v1900, %v1901
  %v1903 = vtanh.pop %v1902
  %v1904 = vmul.f32 %v1898, %v1903
  %s1905 = scalar_lea.vmem %s4, 56
  %1906 = vst [vmem:[%s1905] sm:$0xff] %v1904
  %1907 = vst [vmem:[#allocation2] sm:$0xff] %v1904
  %1908 = vst [vmem:[#allocation3] sm:$0xff] %v1902
  // Predicated region
  $region22: #{lstm_forward.1} parent=0 // pred_check
    %p1909 = pneg %p19
  $region23: #{lstm_forward.1} parent=0 // pred_check_branch
    %1911 = sbr.rel (%p1909) target = $region25
  $region24: #{lstm_forward.1} parent=0 // pred_region
    %1912 = vst [vmem:[%s5] sm:$0xff] %v1902
  $region25: #{lstm_forward.1} parent=0 // pred_fallthru
    _
  // Predicated region
  $region26: #{lstm_forward.1} parent=0 // pred_check
    _
  $region27: #{lstm_forward.1} parent=0 // pred_check_branch
    %1914 = sbr.rel (0) target = $region29
  $region28: #{lstm_forward.1} parent=0 // pred_region
    _
  $region29: #{lstm_forward.1} parent=0 // pred_fallthru
    _
  // Predicated region
  $region30: #{lstm_forward.1} parent=0 // pred_check
    _
  $region31: #{lstm_forward.1} parent=0 // pred_check_branch
    %1916 = sbr.rel (0) target = $region33
  $region32: #{lstm_forward.1} parent=0 // pred_region
    _
  $region33: #{lstm_forward.1} parent=0 // pred_fallthru
    _
  // Predicated region
  $region34: #{lstm_forward.1} parent=0 // pred_check
    _
  $region35: #{lstm_forward.1} parent=0 // pred_check_branch
    %1918 = sbr.rel (0) target = $region37
  $region36: #{lstm_forward.1} parent=0 // pred_region
    _
  $region37: #{lstm_forward.1} parent=0 // pred_fallthru
    _
  // Predicated region
  $region38: #{lstm_forward.1} parent=0 // pred_check
    _
  $region39: #{lstm_forward.1} parent=0 // pred_check_branch
    %1920 = sbr.rel (0) target = $region41
  $region40: #{lstm_forward.1} parent=0 // pred_region
    _
  $region41: #{lstm_forward.1} parent=0 // pred_fallthru
    _

</llo_original>
